<compile_context>
chip_gen: v5e
topology: v5e:2x2
jax: 0.10.0
libtpu: 0.0.40
codegen_flags: <defaults>
</compile_context>

<pallas_src>
import math
from functools import partial

import jax
import jax.numpy as jnp
from jax.experimental import pallas as pl
from jax.experimental.pallas import tpu as pltpu

_EPS = 1e-5
_TILE_M = 512                      # M-tile target (rows of the im2col matrix)
_PARALLEL_1D = pltpu.CompilerParams(dimension_semantics=("parallel",))


def _round_up(x, m):
    return (x + m - 1) // m * m


def _choose_tile(m, target=_TILE_M):
    """Pick an M tile (multiple of 16) and the padded M."""
    if m <= target:
        tm = max(_round_up(m, 16), 16)
        return tm, tm
    return target, _round_up(m, target)


# ----------------------------------------------------------------------------
# Pallas kernels
# ----------------------------------------------------------------------------
def _matmul_stats_kernel(p_ref, w_ref, o_ref, sum_ref, ssq_ref):
    """Conv-as-matmul tile + per-tile per-channel partial sum / sum-of-squares."""
    acc = jnp.dot(p_ref[...], w_ref[...], preferred_element_type=jnp.float32)
    o_ref[...] = acc.astype(o_ref.dtype)
    sum_ref[...] = jnp.sum(acc, axis=0, keepdims=True)[None]
    ssq_ref[...] = jnp.sum(acc * acc, axis=0, keepdims=True)[None]


def _make_bn_act_kernel(do_relu: bool, has_res: bool):
    """Per-channel affine (folded BN) + optional residual add + optional ReLU."""

    def kernel(*refs):
        if has_res:
            c_ref, s_ref, t_ref, r_ref, o_ref = refs
        else:
            c_ref, s_ref, t_ref, o_ref = refs
        y = c_ref[...].astype(jnp.float32) * s_ref[...] + t_ref[...]
        if has_res:
            y = y + r_ref[...].astype(jnp.float32)
        if do_relu:
            y = jnp.maximum(y, 0.0)
        o_ref[...] = y.astype(o_ref.dtype)

    return kernel


def _maxpool_kernel(t_ref, o_ref):
    # t_ref: (9, tm, C) window taps -> elementwise max over the 9 taps.
    acc = t_ref[0]
    for i in range(1, 9):
        acc = jnp.maximum(acc, t_ref[i])
    o_ref[...] = acc.astype(o_ref.dtype)


# ----------------------------------------------------------------------------
# JAX-side glue: im2col patch extraction (layout plumbing only)
# ----------------------------------------------------------------------------
def _extract_patches(x, kh, kw, stride, dilation, padding):
    """x: NHWC -> (N*Ho*Wo, kh*kw*C) patches (tap-major, channel-minor)."""
    n, h, w, c = x.shape
    xp = jnp.pad(x, ((0, 0), (padding, padding), (padding, padding), (0, 0)))
    ho = (h + 2 * padding - dilation * (kh - 1) - 1) // stride + 1
    wo = (w + 2 * padding - dilation * (kw - 1) - 1) // stride + 1
    taps = []
    for i in range(kh):
        for j in range(kw):
            r0 = i * dilation
            c0 = j * dilation
            taps.append(
                xp[:, r0 : r0 + stride * (ho - 1) + 1 : stride,
                      c0 : c0 + stride * (wo - 1) + 1 : stride, :]
            )
    patches = jnp.stack(taps, axis=3)                       # (N, Ho, Wo, kh*kw, C)
    return patches.reshape(n * ho * wo, kh * kw * c), (n, ho, wo)


# ----------------------------------------------------------------------------
# Conv + BN (+ residual) (+ ReLU): two tiled pallas_calls
# ----------------------------------------------------------------------------
@partial(jax.jit, static_argnames=("stride", "dilation", "padding", "relu"))
def conv_bn(x, w_oihw, gamma, beta, residual=None, *,
            stride, dilation, padding, relu):
    cout, cin, kh, kw = w_oihw.shape
    patches, (n, ho, wo) = _extract_patches(x, kh, kw, stride, dilation, padding)
    m = patches.shape[0]
    k = patches.shape[1]

    # Zero-pad contraction dim K to a multiple of 16 (bf16 sublane packing).
    k_pad = _round_up(k, 16)
    if k_pad != k:
        patches = jnp.pad(patches, ((0, 0), (0, k_pad - k)))
    wmat = jnp.transpose(w_oihw, (2, 3, 1, 0)).reshape(k, cout)
    if k_pad != k:
        wmat = jnp.pad(wmat, ((0, k_pad - k), (0, 0)))

    patches = patches.astype(jnp.bfloat16)
    wmat = wmat.astype(jnp.bfloat16)

    # Zero-pad M to a tile multiple.  Padded patch rows are exactly zero, hence
    # contribute 0 to both sum and sum-of-squares -> BN stats stay exact when
    # divided by the true M.
    tm, m_pad = _choose_tile(m)
    if m_pad != m:
        patches = jnp.pad(patches, ((0, m_pad - m), (0, 0)))
    mt = m_pad // tm

    # -------- pass 1: tiled matmul + per-tile BN partial statistics ----------
    conv_out, psum, pssq = pl.pallas_call(
        _matmul_stats_kernel,
        out_shape=(
            jax.ShapeDtypeStruct((m_pad, cout), jnp.bfloat16),
            jax.ShapeDtypeStruct((mt, 1, cout), jnp.float32),
            jax.ShapeDtypeStruct((mt, 1, cout), jnp.float32),
        ),
        grid=(mt,),
        in_specs=[
            pl.BlockSpec((tm, k_pad), lambda i: (i, 0)),
            pl.BlockSpec((k_pad, cout), lambda i: (0, 0)),   # weight stays resident
        ],
        out_specs=(
            pl.BlockSpec((tm, cout), lambda i: (i, 0)),
            pl.BlockSpec((1, 1, cout), lambda i: (i, 0, 0)),
            pl.BlockSpec((1, 1, cout), lambda i: (i, 0, 0)),
        ),
        compiler_params=_PARALLEL_1D,
    )(patches, wmat)

    # -------- tiny per-channel reduction (plain JAX) --------------------------
    csum = jnp.sum(psum, axis=0).reshape(cout)
    cssq = jnp.sum(pssq, axis=0).reshape(cout)
    mean = csum / m
    var = jnp.maximum(cssq / m - mean * mean, 0.0)
    scale = gamma.astype(jnp.float32) * jax.lax.rsqrt(var + _EPS)
    shift = beta.astype(jnp.float32) - mean * scale
    scale2 = scale.reshape(1, cout)
    shift2 = shift.reshape(1, cout)

    # -------- pass 2: tiled normalize + residual + ReLU -----------------------
    has_res = residual is not None
    inputs = [conv_out, scale2, shift2]
    in_specs = [
        pl.BlockSpec((tm, cout), lambda i: (i, 0)),
        pl.BlockSpec((1, cout), lambda i: (0, 0)),
        pl.BlockSpec((1, cout), lambda i: (0, 0)),
    ]
    if has_res:
        r = residual.reshape(m, cout).astype(jnp.bfloat16)
        if m_pad != m:
            r = jnp.pad(r, ((0, m_pad - m), (0, 0)))
        inputs.append(r)
        in_specs.append(pl.BlockSpec((tm, cout), lambda i: (i, 0)))

    y = pl.pallas_call(
        _make_bn_act_kernel(relu, has_res),
        out_shape=jax.ShapeDtypeStruct((m_pad, cout), jnp.bfloat16),
        grid=(mt,),
        in_specs=in_specs,
        out_specs=pl.BlockSpec((tm, cout), lambda i: (i, 0)),
        compiler_params=_PARALLEL_1D,
    )(*inputs)

    return y[:m].reshape(n, ho, wo, cout)


# ----------------------------------------------------------------------------
# MaxPool 3x3 / stride 2 / pad 1 (tiled Pallas 9-tap max)
# ----------------------------------------------------------------------------
@jax.jit
def maxpool_3x3_s2_p1(x):
    n, h, w, c = x.shape
    xp = jnp.pad(x, ((0, 0), (1, 1), (1, 1), (0, 0)), constant_values=-jnp.inf)
    ho = (h + 2 - 3) // 2 + 1
    wo = (w + 2 - 3) // 2 + 1
    taps = [
        xp[:, i : i + 2 * (ho - 1) + 1 : 2, j : j + 2 * (wo - 1) + 1 : 2, :]
        for i in range(3) for j in range(3)
    ]
    m = n * ho * wo
    t = jnp.stack(taps, axis=0).reshape(9, m, c)

    tm, m_pad = _choose_tile(m)
    if m_pad != m:
        t = jnp.pad(t, ((0, 0), (0, m_pad - m), (0, 0)))
    mt = m_pad // tm

    out = pl.pallas_call(
        _maxpool_kernel,
        out_shape=jax.ShapeDtypeStruct((m_pad, c), x.dtype),
        grid=(mt,),
        in_specs=[pl.BlockSpec((9, tm, c), lambda i: (0, i, 0))],
        out_specs=pl.BlockSpec((tm, c), lambda i: (i, 0)),
        compiler_params=_PARALLEL_1D,
    )(t)
    return out[:m].reshape(n, ho, wo, c)


# ----------------------------------------------------------------------------
# Parameter construction (deterministic, synthetic)
# ----------------------------------------------------------------------------
def build_params(key):
    keys = iter(jax.random.split(key, 64))

    def conv_w(cin, cout, k):
        std = math.sqrt(2.0 / (cin * k * k))          # He-normal (PyTorch default-ish)
        return jax.random.normal(next(keys), (cout, cin, k, k), jnp.float32) * std

    def bn(cout):
        return jnp.ones((cout,), jnp.float32), jnp.zeros((cout,), jnp.float32)

    def make_block(cin, cout, stride, dilation):
        g1, b1 = bn(cout)
        g2, b2 = bn(cout)
        blk = dict(stride=stride, dilation=dilation,
                   w1=conv_w(cin, cout, 3), g1=g1, b1=b1,
                   w2=conv_w(cout, cout, 3), g2=g2, b2=b2)
        if stride != 1 or cin != cout:
            gd, bd = bn(cout)
            blk.update(wd=conv_w(cin, cout, 1), gd=gd, bd=bd)
        return blk

    gs, bs = bn(64)
    params = {
        "stem": dict(w=conv_w(3, 64, 7), gamma=gs, beta=bs),
        # resnet18 trunk children[:-3] = conv1,bn1,relu,maxpool,layer1,layer2,layer3
        "layer1": [make_block(64, 64, 1, 1), make_block(64, 64, 1, 1)],
        "layer2": [make_block(64, 128, 2, 1), make_block(128, 128, 1, 1)],
        "layer3": [make_block(128, 256, 2, 1), make_block(256, 256, 1, 1)],
        # layer5 = make_layer(BasicBlock, 256, 512, num_blocks=2, stride=1, dilation=2)
        "layer5": [make_block(256, 512, 1, 2), make_block(512, 512, 1, 2)],
    }
    return params


# ----------------------------------------------------------------------------
# Forward pass
# ----------------------------------------------------------------------------
def basic_block_fwd(x, blk):
    s, d = blk["stride"], blk["dilation"]
    out = conv_bn(x, blk["w1"], blk["g1"], blk["b1"],
                  stride=s, dilation=d, padding=d, relu=True)
    if "wd" in blk:
        res = conv_bn(x, blk["wd"], blk["gd"], blk["bd"],
                      stride=s, dilation=1, padding=0, relu=False)
    else:
        res = x
    out = conv_bn(out, blk["w2"], blk["g2"], blk["b2"], residual=res,
                  stride=1, dilation=d, padding=d, relu=True)
    return out


def resnet_basicblock_os16_forward(params, x_nchw):
    x = jnp.transpose(x_nchw, (0, 2, 3, 1)).astype(jnp.bfloat16)   # NCHW -> NHWC
    # stem: conv7x7/s2 + BN + ReLU + maxpool3x3/s2
    x = conv_bn(x, params["stem"]["w"], params["stem"]["gamma"], params["stem"]["beta"],
                stride=2, dilation=1, padding=3, relu=True)
    x = maxpool_3x3_s2_p1(x)
    for layer_name in ("layer1", "layer2", "layer3", "layer5"):
        for blk in params[layer_name]:
            x = basic_block_fwd(x, blk)
    return jnp.transpose(x, (0, 3, 1, 2)).astype(jnp.float32)      # NHWC -> NCHW


# ----------------------------------------------------------------------------
if __name__ == "__main__":
    key = jax.random.PRNGKey(0)
    pkey, xkey = jax.random.split(key)
    params = build_params(pkey)

    # Small image consistent with the module: batch=2, 3-channel 64x64 image.
    x = jax.random.normal(xkey, (2, 3, 64, 64), jnp.float32)

    out = resnet_basicblock_os16_forward(params, x)
    out = jax.block_until_ready(out)

    expected_shape = (2, 512, 4, 4)   # OS16: 64 / 16 = 4, layer5 has 512 channels
    assert out.shape == expected_shape, out.shape
    assert jnp.isfinite(out).all()
    print("KERNEL_OK")
</pallas_src>

<mosaic_0001>
module attributes {stable_mosaic.version = 11 : i64} {
  func.func @_matmul_stats_kernel(%arg0: i32, %arg1: memref<512x160xbf16, #tpu.memory_space<vmem>>, %arg2: memref<160x64xbf16, #tpu.memory_space<vmem>>, %arg3: memref<512x64xbf16, #tpu.memory_space<vmem>>, %arg4: memref<1x1x64xf32, #tpu.memory_space<vmem>>, %arg5: memref<1x1x64xf32, #tpu.memory_space<vmem>>) attributes {dimension_semantics = [#tpu.dimension_semantics<parallel>], iteration_bounds = array<i64: 4>, scalar_prefetch = 0 : i64, scratch_operands = 0 : i64, tpu.core_type = #tpu.core_type<tc>, window_params = [{transform_indices = @transform_0, window_bounds = array<i64: 512, 160>}, {pipeline_mode = #tpu.pipeline_mode<synchronous>, transform_indices = @transform_1, window_bounds = array<i64: 160, 64>}, {transform_indices = @transform_2, window_bounds = array<i64: 512, 64>}, {transform_indices = @transform_3, window_bounds = array<i64: 1, 1, 64>}, {transform_indices = @transform_4, window_bounds = array<i64: 1, 1, 64>}]} {
    %c0 = arith.constant 0 : index
    %c0_0 = arith.constant 0 : index
    %0 = vector.load %arg1[%c0, %c0_0] : memref<512x160xbf16, #tpu.memory_space<vmem>>, vector<512x160xbf16>
    %c0_1 = arith.constant 0 : index
    %c0_2 = arith.constant 0 : index
    %1 = vector.load %arg2[%c0_1, %c0_2] : memref<160x64xbf16, #tpu.memory_space<vmem>>, vector<160x64xbf16>
    %cst = arith.constant dense<0.000000e+00> : vector<512x64xf32>
    %2 = tpu.matmul %0, %1, %cst {dimension_numbers = #tpu.dot_dimension_numbers<[1], [0], [0], [1], [0, 0, 1, 1], [], []>} : vector<512x160xbf16>, vector<160x64xbf16>, vector<512x64xf32> -> vector<512x64xf32>
    %3 = arith.truncf %2 : vector<512x64xf32> to vector<512x64xbf16>
    %c0_3 = arith.constant 0 : index
    %c0_4 = arith.constant 0 : index
    %4 = vector.load %arg3[%c0_3, %c0_4] : memref<512x64xbf16, #tpu.memory_space<vmem>>, vector<512x64xbf16>
    tpu.vector_store %arg3[%c0_3, %c0_4], %3 {strides = array<i32>} : memref<512x64xbf16, #tpu.memory_space<vmem>>, vector<512x64xbf16>,
    %cst_5 = arith.constant dense<0.000000e+00> : vector<64xf32>
    %5 = vector.multi_reduction <add>, %2, %cst_5 [0] : vector<512x64xf32> to vector<64xf32>
    %6 = vector.shape_cast %5 : vector<64xf32> to vector<1x64xf32>
    %7 = vector.shape_cast %6 : vector<1x64xf32> to vector<1x1x64xf32>
    %c0_6 = arith.constant 0 : index
    %c0_7 = arith.constant 0 : index
    %c0_8 = arith.constant 0 : index
    %8 = vector.load %arg4[%c0_6, %c0_7, %c0_8] : memref<1x1x64xf32, #tpu.memory_space<vmem>>, vector<1x1x64xf32>
    tpu.vector_store %arg4[%c0_6, %c0_7, %c0_8], %7 {strides = array<i32>} : memref<1x1x64xf32, #tpu.memory_space<vmem>>, vector<1x1x64xf32>,
    %9 = arith.mulf %2, %2 : vector<512x64xf32>
    %cst_9 = arith.constant dense<0.000000e+00> : vector<64xf32>
    %10 = vector.multi_reduction <add>, %9, %cst_9 [0] : vector<512x64xf32> to vector<64xf32>
    %11 = vector.shape_cast %10 : vector<64xf32> to vector<1x64xf32>
    %12 = vector.shape_cast %11 : vector<1x64xf32> to vector<1x1x64xf32>
    %c0_10 = arith.constant 0 : index
    %c0_11 = arith.constant 0 : index
    %c0_12 = arith.constant 0 : index
    %13 = vector.load %arg5[%c0_10, %c0_11, %c0_12] : memref<1x1x64xf32, #tpu.memory_space<vmem>>, vector<1x1x64xf32>
    tpu.vector_store %arg5[%c0_10, %c0_11, %c0_12], %12 {strides = array<i32>} : memref<1x1x64xf32, #tpu.memory_space<vmem>>, vector<1x1x64xf32>,
    return
  }
  func.func @transform_0(%arg0: i32) -> (i32, i32) {
    %c0_i32 = arith.constant 0 : i32
    %c0_i32_0 = arith.constant 0 : i32
    return %arg0, %c0_i32 : i32, i32
  }
  func.func @transform_1(%arg0: i32) -> (i32, i32) {
    %c0_i32 = arith.constant 0 : i32
    %c0_i32_0 = arith.constant 0 : i32
    %c0_i32_1 = arith.constant 0 : i32
    return %c0_i32, %c0_i32_0 : i32, i32
  }
  func.func @transform_2(%arg0: i32) -> (i32, i32) {
    %c0_i32 = arith.constant 0 : i32
    %c0_i32_0 = arith.constant 0 : i32
    return %arg0, %c0_i32 : i32, i32
  }
  func.func @transform_3(%arg0: i32) -> (i32, i32, i32) {
    %c0_i32 = arith.constant 0 : i32
    %c0_i32_0 = arith.constant 0 : i32
    %c0_i32_1 = arith.constant 0 : i32
    return %arg0, %c0_i32, %c0_i32_0 : i32, i32, i32
  }
  func.func @transform_4(%arg0: i32) -> (i32, i32, i32) {
    %c0_i32 = arith.constant 0 : i32
    %c0_i32_0 = arith.constant 0 : i32
    %c0_i32_1 = arith.constant 0 : i32
    return %arg0, %c0_i32, %c0_i32_0 : i32, i32, i32
  }
}

module attributes {stable_mosaic.version = 11 : i64} {
  func.func @kernel(%arg0: i32, %arg1: memref<512x64xbf16, #tpu.memory_space<vmem>>, %arg2: memref<1x64xf32, #tpu.memory_space<vmem>>, %arg3: memref<1x64xf32, #tpu.memory_space<vmem>>, %arg4: memref<512x64xbf16, #tpu.memory_space<vmem>>) attributes {dimension_semantics = [#tpu.dimension_semantics<parallel>], iteration_bounds = array<i64: 4>, scalar_prefetch = 0 : i64, scratch_operands = 0 : i64, tpu.core_type = #tpu.core_type<tc>, window_params = [{transform_indices = @transform_0, window_bounds = array<i64: 512, 64>}, {pipeline_mode = #tpu.pipeline_mode<synchronous>, transform_indices = @transform_1, window_bounds = array<i64: 1, 64>}, {pipeline_mode = #tpu.pipeline_mode<synchronous>, transform_indices = @transform_2, window_bounds = array<i64: 1, 64>}, {transform_indices = @transform_3, window_bounds = array<i64: 512, 64>}]} {
    %c0 = arith.constant 0 : index
    %c0_0 = arith.constant 0 : index
    %0 = vector.load %arg1[%c0, %c0_0] : memref<512x64xbf16, #tpu.memory_space<vmem>>, vector<512x64xbf16>
    %1 = arith.extf %0 : vector<512x64xbf16> to vector<512x64xf32>
    %c0_1 = arith.constant 0 : index
    %c0_2 = arith.constant 0 : index
    %2 = vector.load %arg2[%c0_1, %c0_2] : memref<1x64xf32, #tpu.memory_space<vmem>>, vector<1x64xf32>
    %3 = vector.broadcast %2 : vector<1x64xf32> to vector<512x64xf32>
    %4 = arith.mulf %1, %3 : vector<512x64xf32>
    %c0_3 = arith.constant 0 : index
    %c0_4 = arith.constant 0 : index
    %5 = vector.load %arg3[%c0_3, %c0_4] : memref<1x64xf32, #tpu.memory_space<vmem>>, vector<1x64xf32>
    %6 = vector.broadcast %5 : vector<1x64xf32> to vector<512x64xf32>
    %7 = arith.addf %4, %6 : vector<512x64xf32>
    %cst = arith.constant 0.000000e+00 : f32
    %8 = vector.broadcast %cst : f32 to vector<512x64xf32>
    %9 = arith.maximumf %7, %8 : vector<512x64xf32>
    %10 = arith.truncf %9 : vector<512x64xf32> to vector<512x64xbf16>
    %c0_5 = arith.constant 0 : index
    %c0_6 = arith.constant 0 : index
    %11 = vector.load %arg4[%c0_5, %c0_6] : memref<512x64xbf16, #tpu.memory_space<vmem>>, vector<512x64xbf16>
    tpu.vector_store %arg4[%c0_5, %c0_6], %10 {strides = array<i32>} : memref<512x64xbf16, #tpu.memory_space<vmem>>, vector<512x64xbf16>,
    return
  }
  func.func @transform_0(%arg0: i32) -> (i32, i32) {
    %c0_i32 = arith.constant 0 : i32
    %c0_i32_0 = arith.constant 0 : i32
    return %arg0, %c0_i32 : i32, i32
  }
  func.func @transform_1(%arg0: i32) -> (i32, i32) {
    %c0_i32 = arith.constant 0 : i32
    %c0_i32_0 = arith.constant 0 : i32
    %c0_i32_1 = arith.constant 0 : i32
    return %c0_i32, %c0_i32_0 : i32, i32
  }
  func.func @transform_2(%arg0: i32) -> (i32, i32) {
    %c0_i32 = arith.constant 0 : i32
    %c0_i32_0 = arith.constant 0 : i32
    %c0_i32_1 = arith.constant 0 : i32
    return %c0_i32, %c0_i32_0 : i32, i32
  }
  func.func @transform_3(%arg0: i32) -> (i32, i32) {
    %c0_i32 = arith.constant 0 : i32
    %c0_i32_0 = arith.constant 0 : i32
    return %arg0, %c0_i32 : i32, i32
  }
}

</mosaic_0001>

<llo_original>
// kernel: conv_bn.3
$region0: #{conv_bn.3}
  #allocation0 [shape = 'u32[]', space=smem, size = 0x4, offset = 0x4, fixed_abs, tag = 'smem constant byte address 0x4 - core index']
  #allocation1 [shape = 'u32[72,128]{1,0:T(1,128)}', space=vmem, size = 0x9000, scoped, tag = 'internal scratch']
  %s0 = inlined_call_operand.vmem [shape: bf16[2048,64], index: 0, kind: input, shape index: {}]
  %s1 = inlined_call_operand.vmem [shape: f32[1,64], index: 1, kind: input, shape index: {}]
  %s2 = inlined_call_operand.vmem [shape: f32[1,64], index: 2, kind: input, shape index: {}]
  %s3 = inlined_call_operand.hbm [shape: bf16[2048,64], index: 3, kind: output, shape index: {}]
  %s4 = sld [smem:[#allocation0]]
  $region45: #{conv_bn.3} parent=0
    _
  %s6 = ssub.s32 1, %s4
  %s7 = scalar_select 0, %s6, %s4
  $region1: #{conv_bn.3} parent=0
    #allocation2 [shape = 'u8[262144]{0}', space=vmem, size = 0x40000, scoped, tag = 'output window, operand 0']
    #allocation3 [shape = 's32[2]{0}', space=sflag, size = 0x8, scoped, tag = 'scoped memory for conv_bn.3']
    %8 = vsyncpa [#allocation3], 0
    %s9 = scalar_lea.sflag [#allocation3], 1
    %10 = vsyncpa %s9, 0
    loop: start=0, step=1, limit=6
    $region2: #{conv_bn.3} parent=1 // loop_pre_header
      _
    $region3: #{conv_bn.3} parent=1 // loop_header
      %s12 = sphi 0, %s16
      %p13 = scmp.ge.s32.totalorder %s12, 6
      %s22 = sphi 0, %s24
      %s25 = sphi 0, %s22
      %s26 = sphi 0, %s25
      %s42 = sphi 0, %s26
      %s46 = sphi 0, %s46
      %s48 = sphi 0, %s46
      %s49 = sphi 0, %s48
      %s63 = sphi 0, %s49
      %s67 = sphi 0, %s67
      %s69 = sphi 0, %s67
      %s70 = sphi 0, %s69
      %s84 = sphi 0, %s70
      %s90 = sphi 0, %s92
      %s93 = sphi 0, %s90
      %s94 = sphi 0, %s93
      %s110 = sphi 0, %s94
    $region4: #{conv_bn.3} parent=1 // loop_header_branch
      %15 = sbr.rel (%p13) target = $region8
    $region5: #{conv_bn.3} parent=1 // loop_body
      %s17 = ssub.s32 %s12, 1
      %s18 = ssub.s32 %s12, 2
      %s19 = sadd.s32 %s12, 1
      %s20 = ssub.s32 %s12, %s19
      %p21 = scmp.eq.s32.totalorder %s20, 0
      %s23 = sadd.s32 %s22, 1
      %s24 = scalar_select %p21, %s22, %s23
      %p27 = pneg %p21
      %p28 = scmp.eq.s32.totalorder %s12, 3
      %p29 = por %p27, %p28
      %p30 = scmp.ne.s32.totalorder %s22, %s25
      %p31 = scmp.eq.s32.totalorder %s12, 0
      %p32 = por %p30, %p31
      %p33 = scmp.ne.s32.totalorder %s22, %s25
      %p34 = scmp.eq.s32.totalorder %s17, 3
      %p35 = por %p33, %p34
      %p36 = scmp.ne.s32.totalorder %s25, %s26
      %p37 = scmp.eq.s32.totalorder %s17, 0
      %p38 = por %p36, %p37
      %p39 = scmp.ne.s32.totalorder %s25, %s26
      %p40 = scmp.eq.s32.totalorder %s18, 3
      %p41 = por %p39, %p40
      %p43 = scmp.ne.s32.totalorder %s26, %s42
      %p44 = scmp.eq.s32.totalorder %s18, 0
      %p45 = por %p43, %p44
      %s47 = sadd.s32 %s46, 1
      %p50 = scmp.eq.s32.totalorder %s12, 3
      %p51 = scmp.ne.s32.totalorder %s46, %s48
      %p52 = scmp.eq.s32.totalorder %s12, 0
      %p53 = por %p51, %p52
      %p54 = scmp.ne.s32.totalorder %s46, %s48
      %p55 = scmp.eq.s32.totalorder %s17, 3
      %p56 = por %p54, %p55
      %p57 = scmp.ne.s32.totalorder %s48, %s49
      %p58 = scmp.eq.s32.totalorder %s17, 0
      %p59 = por %p57, %p58
      %p60 = scmp.ne.s32.totalorder %s48, %s49
      %p61 = scmp.eq.s32.totalorder %s18, 3
      %p62 = por %p60, %p61
      %p64 = scmp.ne.s32.totalorder %s49, %s63
      %p65 = scmp.eq.s32.totalorder %s18, 0
      %p66 = por %p64, %p65
      %s68 = sadd.s32 %s67, 1
      %p71 = scmp.eq.s32.totalorder %s12, 3
      %p72 = scmp.ne.s32.totalorder %s67, %s69
      %p73 = scmp.eq.s32.totalorder %s12, 0
      %p74 = por %p72, %p73
      %p75 = scmp.ne.s32.totalorder %s67, %s69
      %p76 = scmp.eq.s32.totalorder %s17, 3
      %p77 = por %p75, %p76
      %p78 = scmp.ne.s32.totalorder %s69, %s70
      %p79 = scmp.eq.s32.totalorder %s17, 0
      %p80 = por %p78, %p79
      %p81 = scmp.ne.s32.totalorder %s69, %s70
      %p82 = scmp.eq.s32.totalorder %s18, 3
      %p83 = por %p81, %p82
      %p85 = scmp.ne.s32.totalorder %s70, %s84
      %p86 = scmp.eq.s32.totalorder %s18, 0
      %p87 = por %p85, %p86
      %s88 = ssub.s32 %s12, %s19
      %p89 = scmp.eq.s32.totalorder %s88, 0
      %s91 = sadd.s32 %s90, 1
      %s92 = scalar_select %p89, %s90, %s91
      %p95 = pneg %p89
      %p96 = scmp.eq.s32.totalorder %s12, 3
      %p97 = por %p95, %p96
      %p98 = scmp.ne.s32.totalorder %s90, %s93
      %p99 = scmp.eq.s32.totalorder %s12, 0
      %p100 = por %p98, %p99
      %p101 = scmp.ne.s32.totalorder %s90, %s93
      %p102 = scmp.eq.s32.totalorder %s17, 3
      %p103 = por %p101, %p102
      %p104 = scmp.ne.s32.totalorder %s93, %s94
      %p105 = scmp.eq.s32.totalorder %s17, 0
      %p106 = por %p104, %p105
      %p107 = scmp.ne.s32.totalorder %s93, %s94
      %p108 = scmp.eq.s32.totalorder %s18, 3
      %p109 = por %p107, %p108
      %p111 = scmp.ne.s32.totalorder %s94, %s110
      %p112 = scmp.eq.s32.totalorder %s18, 0
      %p113 = por %p111, %p112
      %p114 = scmp.le.s32.totalorder 1, %s12
      %p115 = scmp.lt.s32.totalorder %s12, 5
      %p116 = pnand %p114, %p115
      %p117 = pneg %p116
      // Predicated region
      $region9: #{conv_bn.3} parent=5 // pred_check
        _
      $region10: #{conv_bn.3} parent=5 // pred_check_branch
        %119 = sbr.rel (%p116) target = $region12
      $region11: #{conv_bn.3} parent=5 // pred_region
        %s120 = ssub.s32 %s12, 1
        // Predicated region
        $region13: #{conv_bn.3} parent=11 // pred_check
          %p121 = pneg %p59
        $region14: #{conv_bn.3} parent=11 // pred_check_branch
          %123 = sbr.rel (%p121) target = $region16
        $region15: #{conv_bn.3} parent=11 // pred_region
          _
        $region16: #{conv_bn.3} parent=11 // pred_fallthru
          _
        // Predicated region
        $region17: #{conv_bn.3} parent=11 // pred_check
          %p124 = pneg %p80
        $region18: #{conv_bn.3} parent=11 // pred_check_branch
          %126 = sbr.rel (%p124) target = $region20
        $region19: #{conv_bn.3} parent=11 // pred_region
          _
        $region20: #{conv_bn.3} parent=11 // pred_fallthru
          _
      $region12: #{conv_bn.3} parent=5 // pred_fallthru
        _
      %p127 = scmp.lt.s32.totalorder %s12, 4
      // Predicated region
      $region21: #{conv_bn.3} parent=5 // pred_check
        %p128 = pneg %p127
      $region22: #{conv_bn.3} parent=5 // pred_check_branch
        %130 = sbr.rel (%p128) target = $region24
      $region23: #{conv_bn.3} parent=5 // pred_region
        // Predicated region
        $region25: #{conv_bn.3} parent=23 // pred_check
          %p131 = pneg %p32
        $region26: #{conv_bn.3} parent=23 // pred_check_branch
          %133 = sbr.rel (%p131) target = $region28
        $region27: #{conv_bn.3} parent=23 // pred_region
          %s134 = smul.u32 64, %s12
          %p135 = scmp.lt.s32.totalorder %s134, 255
          %s136 = scalar_select %p135, %s134, 255
          %s137 = smul.addr %s136, 4
          %s138 = scalar_lea.vmem %s0, %s137
          %s139 = smul.u32 64, %s12
        $region28: #{conv_bn.3} parent=23 // pred_fallthru
          _
      $region24: #{conv_bn.3} parent=5 // pred_fallthru
        _
      %p140 = scmp.le.s32.totalorder 1, %s12
      %p141 = scmp.lt.s32.totalorder %s12, 5
      %p142 = pnand %p140, %p141
      %p143 = pneg %p142
      // Predicated region
      $region29: #{conv_bn.3} parent=5 // pred_check
        _
      $region30: #{conv_bn.3} parent=5 // pred_check_branch
        %145 = sbr.rel (%p142) target = $region32
      $region31: #{conv_bn.3} parent=5 // pred_region
        %s146 = ssub.s32 %s12, 1
        %s147 = smul.u32 64, %s17
        %p148 = scmp.lt.s32.totalorder %s147, 255
        %s149 = scalar_select %p148, %s147, 255
        %s150 = smul.addr %s149, 4
        %s151 = scalar_lea.vmem %s0, %s150
        %p152 = pneg %p38
        %p153 = pneg %p35
        %p154 = pneg %p59
        %p155 = pneg %p56
        %p156 = pneg %p80
        %p157 = pneg %p77
        %p158 = pneg %p106
        %p159 = pneg %p103
        %s160 = sand.u32 %s93, 1
        %s161 = scalar_lea.sflag [#allocation3], %s160
        %s162 = sand.u32 %s93, 1
        %s163 = smul.addr %s162, 256
        %s164 = scalar_lea.vmem [#allocation2], %s163
        %s165 = smul.u32 64, %s17
        %p166 = scmp.lt.s32.totalorder %s165, 255
        %s167 = scalar_select %p166, %s165, 255
        %s168 = smul.addr %s167, 4
        %s169 = scalar_lea.vmem %s0, %s168
        %s170 = smul.u32 64, %s17
        %s171 = smul.u32 64, %s17
        %v172 = vld [vmem:[%s169] sm:$0xf]
        %v173 = vld [vmem:[%s169 + $0x4] sm:$0xf]
        %v174 = vld [vmem:[%s169 + $0x8] sm:$0xf]
        %v175 = vld [vmem:[%s169 + $0xc] sm:$0xf]
        %v176 = vld [vmem:[%s169 + $0x10] sm:$0xf]
        %v177 = vld [vmem:[%s169 + $0x14] sm:$0xf]
        %v178 = vld [vmem:[%s169 + $0x18] sm:$0xf]
        %v179 = vld [vmem:[%s169 + $0x1c] sm:$0xf]
        %v180 = vld [vmem:[%s169 + $0x20] sm:$0xf]
        %v181 = vld [vmem:[%s169 + $0x24] sm:$0xf]
        %v182 = vld [vmem:[%s169 + $0x28] sm:$0xf]
        %v183 = vld [vmem:[%s169 + $0x2c] sm:$0xf]
        %v184 = vld [vmem:[%s169 + $0x30] sm:$0xf]
        %v185 = vld [vmem:[%s169 + $0x34] sm:$0xf]
        %v186 = vld [vmem:[%s169 + $0x38] sm:$0xf]
        %v187 = vld [vmem:[%s169 + $0x3c] sm:$0xf]
        %v188 = vld [vmem:[%s169 + $0x40] sm:$0xf]
        %v189 = vld [vmem:[%s169 + $0x44] sm:$0xf]
        %v190 = vld [vmem:[%s169 + $0x48] sm:$0xf]
        %v191 = vld [vmem:[%s169 + $0x4c] sm:$0xf]
        %v192 = vld [vmem:[%s169 + $0x50] sm:$0xf]
        %v193 = vld [vmem:[%s169 + $0x54] sm:$0xf]
        %v194 = vld [vmem:[%s169 + $0x58] sm:$0xf]
        %v195 = vld [vmem:[%s169 + $0x5c] sm:$0xf]
        %v196 = vld [vmem:[%s169 + $0x60] sm:$0xf]
        %v197 = vld [vmem:[%s169 + $0x64] sm:$0xf]
        %v198 = vld [vmem:[%s169 + $0x68] sm:$0xf]
        %v199 = vld [vmem:[%s169 + $0x6c] sm:$0xf]
        %v200 = vld [vmem:[%s169 + $0x70] sm:$0xf]
        %v201 = vld [vmem:[%s169 + $0x74] sm:$0xf]
        %v202 = vld [vmem:[%s169 + $0x78] sm:$0xf]
        %v203 = vld [vmem:[%s169 + $0x7c] sm:$0xf]
        %v204 = vld [vmem:[%s169 + $0x80] sm:$0xf]
        %v205 = vld [vmem:[%s169 + $0x84] sm:$0xf]
        %v206 = vld [vmem:[%s169 + $0x88] sm:$0xf]
        %v207 = vld [vmem:[%s169 + $0x8c] sm:$0xf]
        %v208 = vld [vmem:[%s169 + $0x90] sm:$0xf]
        %v209 = vld [vmem:[%s169 + $0x94] sm:$0xf]
        %v210 = vld [vmem:[%s169 + $0x98] sm:$0xf]
        %v211 = vld [vmem:[%s169 + $0x9c] sm:$0xf]
        %v212 = vld [vmem:[%s169 + $0xa0] sm:$0xf]
        %v213 = vld [vmem:[%s169 + $0xa4] sm:$0xf]
        %v214 = vld [vmem:[%s169 + $0xa8] sm:$0xf]
        %v215 = vld [vmem:[%s169 + $0xac] sm:$0xf]
        %v216 = vld [vmem:[%s169 + $0xb0] sm:$0xf]
        %v217 = vld [vmem:[%s169 + $0xb4] sm:$0xf]
        %v218 = vld [vmem:[%s169 + $0xb8] sm:$0xf]
        %v219 = vld [vmem:[%s169 + $0xbc] sm:$0xf]
        %v220 = vld [vmem:[%s169 + $0xc0] sm:$0xf]
        %v221 = vld [vmem:[%s169 + $0xc4] sm:$0xf]
        %v222 = vld [vmem:[%s169 + $0xc8] sm:$0xf]
        %v223 = vld [vmem:[%s169 + $0xcc] sm:$0xf]
        %v224 = vld [vmem:[%s169 + $0xd0] sm:$0xf]
        %v225 = vld [vmem:[%s169 + $0xd4] sm:$0xf]
        %v226 = vld [vmem:[%s169 + $0xd8] sm:$0xf]
        %v227 = vld [vmem:[%s169 + $0xdc] sm:$0xf]
        %v228 = vld [vmem:[%s169 + $0xe0] sm:$0xf]
        %v229 = vld [vmem:[%s169 + $0xe4] sm:$0xf]
        %v230 = vld [vmem:[%s169 + $0xe8] sm:$0xf]
        %v231 = vld [vmem:[%s169 + $0xec] sm:$0xf]
        %v232 = vld [vmem:[%s169 + $0xf0] sm:$0xf]
        %v233 = vld [vmem:[%s169 + $0xf4] sm:$0xf]
        %v234 = vld [vmem:[%s169 + $0xf8] sm:$0xf]
        %v235 = vld [vmem:[%s169 + $0xfc] sm:$0xf]
        %v236 = vunpack.c.l.bf16 %v172
        %v237 = vunpack.c.l.bf16 %v173
        %v238 = vunpack.c.l.bf16 %v174
        %v239 = vunpack.c.l.bf16 %v175
        %v240 = vunpack.c.l.bf16 %v176
        %v241 = vunpack.c.l.bf16 %v177
        %v242 = vunpack.c.l.bf16 %v178
        %v243 = vunpack.c.l.bf16 %v179
        %v244 = vunpack.c.l.bf16 %v180
        %v245 = vunpack.c.l.bf16 %v181
        %v246 = vunpack.c.l.bf16 %v182
        %v247 = vunpack.c.l.bf16 %v183
        %v248 = vunpack.c.l.bf16 %v184
        %v249 = vunpack.c.l.bf16 %v185
        %v250 = vunpack.c.l.bf16 %v186
        %v251 = vunpack.c.l.bf16 %v187
        %v252 = vunpack.c.l.bf16 %v188
        %v253 = vunpack.c.l.bf16 %v189
        %v254 = vunpack.c.l.bf16 %v190
        %v255 = vunpack.c.l.bf16 %v191
        %v256 = vunpack.c.l.bf16 %v192
        %v257 = vunpack.c.l.bf16 %v193
        %v258 = vunpack.c.l.bf16 %v194
        %v259 = vunpack.c.l.bf16 %v195
        %v260 = vunpack.c.l.bf16 %v196
        %v261 = vunpack.c.l.bf16 %v197
        %v262 = vunpack.c.l.bf16 %v198
        %v263 = vunpack.c.l.bf16 %v199
        %v264 = vunpack.c.l.bf16 %v200
        %v265 = vunpack.c.l.bf16 %v201
        %v266 = vunpack.c.l.bf16 %v202
        %v267 = vunpack.c.l.bf16 %v203
        %v268 = vunpack.c.l.bf16 %v204
        %v269 = vunpack.c.l.bf16 %v205
        %v270 = vunpack.c.l.bf16 %v206
        %v271 = vunpack.c.l.bf16 %v207
        %v272 = vunpack.c.l.bf16 %v208
        %v273 = vunpack.c.l.bf16 %v209
        %v274 = vunpack.c.l.bf16 %v210
        %v275 = vunpack.c.l.bf16 %v211
        %v276 = vunpack.c.l.bf16 %v212
        %v277 = vunpack.c.l.bf16 %v213
        %v278 = vunpack.c.l.bf16 %v214
        %v279 = vunpack.c.l.bf16 %v215
        %v280 = vunpack.c.l.bf16 %v216
        %v281 = vunpack.c.l.bf16 %v217
        %v282 = vunpack.c.l.bf16 %v218
        %v283 = vunpack.c.l.bf16 %v219
        %v284 = vunpack.c.l.bf16 %v220
        %v285 = vunpack.c.l.bf16 %v221
        %v286 = vunpack.c.l.bf16 %v222
        %v287 = vunpack.c.l.bf16 %v223
        %v288 = vunpack.c.l.bf16 %v224
        %v289 = vunpack.c.l.bf16 %v225
        %v290 = vunpack.c.l.bf16 %v226
        %v291 = vunpack.c.l.bf16 %v227
        %v292 = vunpack.c.l.bf16 %v228
        %v293 = vunpack.c.l.bf16 %v229
        %v294 = vunpack.c.l.bf16 %v230
        %v295 = vunpack.c.l.bf16 %v231
        %v296 = vunpack.c.l.bf16 %v232
        %v297 = vunpack.c.l.bf16 %v233
        %v298 = vunpack.c.l.bf16 %v234
        %v299 = vunpack.c.l.bf16 %v235
        %v300 = vld [vmem:[%s1] sm:$0x1]
        %v302 = vperm.slane %v300, 0
        %v304 = vmul.f32 %v236, %v302
        %v305 = vmul.f32 %v237, %v302
        %v306 = vmul.f32 %v238, %v302
        %v307 = vmul.f32 %v239, %v302
        %v308 = vmul.f32 %v240, %v302
        %v309 = vmul.f32 %v241, %v302
        %v310 = vmul.f32 %v242, %v302
        %v311 = vmul.f32 %v243, %v302
        %v312 = vmul.f32 %v244, %v302
        %v313 = vmul.f32 %v245, %v302
        %v314 = vmul.f32 %v246, %v302
        %v315 = vmul.f32 %v247, %v302
        %v316 = vmul.f32 %v248, %v302
        %v317 = vmul.f32 %v249, %v302
        %v318 = vmul.f32 %v250, %v302
        %v319 = vmul.f32 %v251, %v302
        %v320 = vmul.f32 %v252, %v302
        %v321 = vmul.f32 %v253, %v302
        %v322 = vmul.f32 %v254, %v302
        %v323 = vmul.f32 %v255, %v302
        %v324 = vmul.f32 %v256, %v302
        %v325 = vmul.f32 %v257, %v302
        %v326 = vmul.f32 %v258, %v302
        %v327 = vmul.f32 %v259, %v302
        %v328 = vmul.f32 %v260, %v302
        %v329 = vmul.f32 %v261, %v302
        %v330 = vmul.f32 %v262, %v302
        %v331 = vmul.f32 %v263, %v302
        %v332 = vmul.f32 %v264, %v302
        %v333 = vmul.f32 %v265, %v302
        %v334 = vmul.f32 %v266, %v302
        %v335 = vmul.f32 %v267, %v302
        %v336 = vmul.f32 %v268, %v302
        %v337 = vmul.f32 %v269, %v302
        %v338 = vmul.f32 %v270, %v302
        %v339 = vmul.f32 %v271, %v302
        %v340 = vmul.f32 %v272, %v302
        %v341 = vmul.f32 %v273, %v302
        %v342 = vmul.f32 %v274, %v302
        %v343 = vmul.f32 %v275, %v302
        %v344 = vmul.f32 %v276, %v302
        %v345 = vmul.f32 %v277, %v302
        %v346 = vmul.f32 %v278, %v302
        %v347 = vmul.f32 %v279, %v302
        %v348 = vmul.f32 %v280, %v302
        %v349 = vmul.f32 %v281, %v302
        %v350 = vmul.f32 %v282, %v302
        %v351 = vmul.f32 %v283, %v302
        %v352 = vmul.f32 %v284, %v302
        %v353 = vmul.f32 %v285, %v302
        %v354 = vmul.f32 %v286, %v302
        %v355 = vmul.f32 %v287, %v302
        %v356 = vmul.f32 %v288, %v302
        %v357 = vmul.f32 %v289, %v302
        %v358 = vmul.f32 %v290, %v302
        %v359 = vmul.f32 %v291, %v302
        %v360 = vmul.f32 %v292, %v302
        %v361 = vmul.f32 %v293, %v302
        %v362 = vmul.f32 %v294, %v302
        %v363 = vmul.f32 %v295, %v302
        %v364 = vmul.f32 %v296, %v302
        %v365 = vmul.f32 %v297, %v302
        %v366 = vmul.f32 %v298, %v302
        %v367 = vmul.f32 %v299, %v302
        %v368 = vld [vmem:[%s2] sm:$0x1]
        %v370 = vperm.slane %v368, 0
        %v372 = vadd.f32 %v304, %v370
        %v373 = vadd.f32 %v305, %v370
        %v374 = vadd.f32 %v306, %v370
        %v375 = vadd.f32 %v307, %v370
        %v376 = vadd.f32 %v308, %v370
        %v377 = vadd.f32 %v309, %v370
        %v378 = vadd.f32 %v310, %v370
        %v379 = vadd.f32 %v311, %v370
        %v380 = vadd.f32 %v312, %v370
        %v381 = vadd.f32 %v313, %v370
        %v382 = vadd.f32 %v314, %v370
        %v383 = vadd.f32 %v315, %v370
        %v384 = vadd.f32 %v316, %v370
        %v385 = vadd.f32 %v317, %v370
        %v386 = vadd.f32 %v318, %v370
        %v387 = vadd.f32 %v319, %v370
        %v388 = vadd.f32 %v320, %v370
        %v389 = vadd.f32 %v321, %v370
        %v390 = vadd.f32 %v322, %v370
        %v391 = vadd.f32 %v323, %v370
        %v392 = vadd.f32 %v324, %v370
        %v393 = vadd.f32 %v325, %v370
        %v394 = vadd.f32 %v326, %v370
        %v395 = vadd.f32 %v327, %v370
        %v396 = vadd.f32 %v328, %v370
        %v397 = vadd.f32 %v329, %v370
        %v398 = vadd.f32 %v330, %v370
        %v399 = vadd.f32 %v331, %v370
        %v400 = vadd.f32 %v332, %v370
        %v401 = vadd.f32 %v333, %v370
        %v402 = vadd.f32 %v334, %v370
        %v403 = vadd.f32 %v335, %v370
        %v404 = vadd.f32 %v336, %v370
        %v405 = vadd.f32 %v337, %v370
        %v406 = vadd.f32 %v338, %v370
        %v407 = vadd.f32 %v339, %v370
        %v408 = vadd.f32 %v340, %v370
        %v409 = vadd.f32 %v341, %v370
        %v410 = vadd.f32 %v342, %v370
        %v411 = vadd.f32 %v343, %v370
        %v412 = vadd.f32 %v344, %v370
        %v413 = vadd.f32 %v345, %v370
        %v414 = vadd.f32 %v346, %v370
        %v415 = vadd.f32 %v347, %v370
        %v416 = vadd.f32 %v348, %v370
        %v417 = vadd.f32 %v349, %v370
        %v418 = vadd.f32 %v350, %v370
        %v419 = vadd.f32 %v351, %v370
        %v420 = vadd.f32 %v352, %v370
        %v421 = vadd.f32 %v353, %v370
        %v422 = vadd.f32 %v354, %v370
        %v423 = vadd.f32 %v355, %v370
        %v424 = vadd.f32 %v356, %v370
        %v425 = vadd.f32 %v357, %v370
        %v426 = vadd.f32 %v358, %v370
        %v427 = vadd.f32 %v359, %v370
        %v428 = vadd.f32 %v360, %v370
        %v429 = vadd.f32 %v361, %v370
        %v430 = vadd.f32 %v362, %v370
        %v431 = vadd.f32 %v363, %v370
        %v432 = vadd.f32 %v364, %v370
        %v433 = vadd.f32 %v365, %v370
        %v434 = vadd.f32 %v366, %v370
        %v435 = vadd.f32 %v367, %v370
        %v436 = vmax.f32 %v372, 0.0
        %v437 = vmax.f32 %v373, 0.0
        %v438 = vmax.f32 %v374, 0.0
        %v439 = vmax.f32 %v375, 0.0
        %v440 = vmax.f32 %v376, 0.0
        %v441 = vmax.f32 %v377, 0.0
        %v442 = vmax.f32 %v378, 0.0
        %v443 = vmax.f32 %v379, 0.0
        %v444 = vmax.f32 %v380, 0.0
        %v445 = vmax.f32 %v381, 0.0
        %v446 = vmax.f32 %v382, 0.0
        %v447 = vmax.f32 %v383, 0.0
        %v448 = vmax.f32 %v384, 0.0
        %v449 = vmax.f32 %v385, 0.0
        %v450 = vmax.f32 %v386, 0.0
        %v451 = vmax.f32 %v387, 0.0
        %v452 = vmax.f32 %v388, 0.0
        %v453 = vmax.f32 %v389, 0.0
        %v454 = vmax.f32 %v390, 0.0
        %v455 = vmax.f32 %v391, 0.0
        %v456 = vmax.f32 %v392, 0.0
        %v457 = vmax.f32 %v393, 0.0
        %v458 = vmax.f32 %v394, 0.0
        %v459 = vmax.f32 %v395, 0.0
        %v460 = vmax.f32 %v396, 0.0
        %v461 = vmax.f32 %v397, 0.0
        %v462 = vmax.f32 %v398, 0.0
        %v463 = vmax.f32 %v399, 0.0
        %v464 = vmax.f32 %v400, 0.0
        %v465 = vmax.f32 %v401, 0.0
        %v466 = vmax.f32 %v402, 0.0
        %v467 = vmax.f32 %v403, 0.0
        %v468 = vmax.f32 %v404, 0.0
        %v469 = vmax.f32 %v405, 0.0
        %v470 = vmax.f32 %v406, 0.0
        %v471 = vmax.f32 %v407, 0.0
        %v472 = vmax.f32 %v408, 0.0
        %v473 = vmax.f32 %v409, 0.0
        %v474 = vmax.f32 %v410, 0.0
        %v475 = vmax.f32 %v411, 0.0
        %v476 = vmax.f32 %v412, 0.0
        %v477 = vmax.f32 %v413, 0.0
        %v478 = vmax.f32 %v414, 0.0
        %v479 = vmax.f32 %v415, 0.0
        %v480 = vmax.f32 %v416, 0.0
        %v481 = vmax.f32 %v417, 0.0
        %v482 = vmax.f32 %v418, 0.0
        %v483 = vmax.f32 %v419, 0.0
        %v484 = vmax.f32 %v420, 0.0
        %v485 = vmax.f32 %v421, 0.0
        %v486 = vmax.f32 %v422, 0.0
        %v487 = vmax.f32 %v423, 0.0
        %v488 = vmax.f32 %v424, 0.0
        %v489 = vmax.f32 %v425, 0.0
        %v490 = vmax.f32 %v426, 0.0
        %v491 = vmax.f32 %v427, 0.0
        %v492 = vmax.f32 %v428, 0.0
        %v493 = vmax.f32 %v429, 0.0
        %v494 = vmax.f32 %v430, 0.0
        %v495 = vmax.f32 %v431, 0.0
        %v496 = vmax.f32 %v432, 0.0
        %v497 = vmax.f32 %v433, 0.0
        %v498 = vmax.f32 %v434, 0.0
        %v499 = vmax.f32 %v435, 0.0
        %v500 = vpack.c.bf16 %v436, %v436
        %v501 = vpack.c.bf16 %v437, %v437
        %v502 = vpack.c.bf16 %v438, %v438
        %v503 = vpack.c.bf16 %v439, %v439
        %v504 = vpack.c.bf16 %v440, %v440
        %v505 = vpack.c.bf16 %v441, %v441
        %v506 = vpack.c.bf16 %v442, %v442
        %v507 = vpack.c.bf16 %v443, %v443
        %v508 = vpack.c.bf16 %v444, %v444
        %v509 = vpack.c.bf16 %v445, %v445
        %v510 = vpack.c.bf16 %v446, %v446
        %v511 = vpack.c.bf16 %v447, %v447
        %v512 = vpack.c.bf16 %v448, %v448
        %v513 = vpack.c.bf16 %v449, %v449
        %v514 = vpack.c.bf16 %v450, %v450
        %v515 = vpack.c.bf16 %v451, %v451
        %v516 = vpack.c.bf16 %v452, %v452
        %v517 = vpack.c.bf16 %v453, %v453
        %v518 = vpack.c.bf16 %v454, %v454
        %v519 = vpack.c.bf16 %v455, %v455
        %v520 = vpack.c.bf16 %v456, %v456
        %v521 = vpack.c.bf16 %v457, %v457
        %v522 = vpack.c.bf16 %v458, %v458
        %v523 = vpack.c.bf16 %v459, %v459
        %v524 = vpack.c.bf16 %v460, %v460
        %v525 = vpack.c.bf16 %v461, %v461
        %v526 = vpack.c.bf16 %v462, %v462
        %v527 = vpack.c.bf16 %v463, %v463
        %v528 = vpack.c.bf16 %v464, %v464
        %v529 = vpack.c.bf16 %v465, %v465
        %v530 = vpack.c.bf16 %v466, %v466
        %v531 = vpack.c.bf16 %v467, %v467
        %v532 = vpack.c.bf16 %v468, %v468
        %v533 = vpack.c.bf16 %v469, %v469
        %v534 = vpack.c.bf16 %v470, %v470
        %v535 = vpack.c.bf16 %v471, %v471
        %v536 = vpack.c.bf16 %v472, %v472
        %v537 = vpack.c.bf16 %v473, %v473
        %v538 = vpack.c.bf16 %v474, %v474
        %v539 = vpack.c.bf16 %v475, %v475
        %v540 = vpack.c.bf16 %v476, %v476
        %v541 = vpack.c.bf16 %v477, %v477
        %v542 = vpack.c.bf16 %v478, %v478
        %v543 = vpack.c.bf16 %v479, %v479
        %v544 = vpack.c.bf16 %v480, %v480
        %v545 = vpack.c.bf16 %v481, %v481
        %v546 = vpack.c.bf16 %v482, %v482
        %v547 = vpack.c.bf16 %v483, %v483
        %v548 = vpack.c.bf16 %v484, %v484
        %v549 = vpack.c.bf16 %v485, %v485
        %v550 = vpack.c.bf16 %v486, %v486
        %v551 = vpack.c.bf16 %v487, %v487
        %v552 = vpack.c.bf16 %v488, %v488
        %v553 = vpack.c.bf16 %v489, %v489
        %v554 = vpack.c.bf16 %v490, %v490
        %v555 = vpack.c.bf16 %v491, %v491
        %v556 = vpack.c.bf16 %v492, %v492
        %v557 = vpack.c.bf16 %v493, %v493
        %v558 = vpack.c.bf16 %v494, %v494
        %v559 = vpack.c.bf16 %v495, %v495
        %v560 = vpack.c.bf16 %v496, %v496
        %v561 = vpack.c.bf16 %v497, %v497
        %v562 = vpack.c.bf16 %v498, %v498
        %v563 = vpack.c.bf16 %v499, %v499
        %vm564 = vcmask 519168
        %565 = vst.msk [vmem:[%s164] sm:$0xf] %vm564, %v500
        %566 = vst.msk [vmem:[%s164 + $0x4] sm:$0xf] %vm564, %v501
        %567 = vst.msk [vmem:[%s164 + $0x8] sm:$0xf] %vm564, %v502
        %568 = vst.msk [vmem:[%s164 + $0xc] sm:$0xf] %vm564, %v503
        %569 = vst.msk [vmem:[%s164 + $0x10] sm:$0xf] %vm564, %v504
        %570 = vst.msk [vmem:[%s164 + $0x14] sm:$0xf] %vm564, %v505
        %571 = vst.msk [vmem:[%s164 + $0x18] sm:$0xf] %vm564, %v506
        %572 = vst.msk [vmem:[%s164 + $0x1c] sm:$0xf] %vm564, %v507
        %573 = vst.msk [vmem:[%s164 + $0x20] sm:$0xf] %vm564, %v508
        %574 = vst.msk [vmem:[%s164 + $0x24] sm:$0xf] %vm564, %v509
        %575 = vst.msk [vmem:[%s164 + $0x28] sm:$0xf] %vm564, %v510
        %576 = vst.msk [vmem:[%s164 + $0x2c] sm:$0xf] %vm564, %v511
        %577 = vst.msk [vmem:[%s164 + $0x30] sm:$0xf] %vm564, %v512
        %578 = vst.msk [vmem:[%s164 + $0x34] sm:$0xf] %vm564, %v513
        %579 = vst.msk [vmem:[%s164 + $0x38] sm:$0xf] %vm564, %v514
        %580 = vst.msk [vmem:[%s164 + $0x3c] sm:$0xf] %vm564, %v515
        %581 = vst.msk [vmem:[%s164 + $0x40] sm:$0xf] %vm564, %v516
        %582 = vst.msk [vmem:[%s164 + $0x44] sm:$0xf] %vm564, %v517
        %583 = vst.msk [vmem:[%s164 + $0x48] sm:$0xf] %vm564, %v518
        %584 = vst.msk [vmem:[%s164 + $0x4c] sm:$0xf] %vm564, %v519
        %585 = vst.msk [vmem:[%s164 + $0x50] sm:$0xf] %vm564, %v520
        %586 = vst.msk [vmem:[%s164 + $0x54] sm:$0xf] %vm564, %v521
        %587 = vst.msk [vmem:[%s164 + $0x58] sm:$0xf] %vm564, %v522
        %588 = vst.msk [vmem:[%s164 + $0x5c] sm:$0xf] %vm564, %v523
        %589 = vst.msk [vmem:[%s164 + $0x60] sm:$0xf] %vm564, %v524
        %590 = vst.msk [vmem:[%s164 + $0x64] sm:$0xf] %vm564, %v525
        %591 = vst.msk [vmem:[%s164 + $0x68] sm:$0xf] %vm564, %v526
        %592 = vst.msk [vmem:[%s164 + $0x6c] sm:$0xf] %vm564, %v527
        %593 = vst.msk [vmem:[%s164 + $0x70] sm:$0xf] %vm564, %v528
        %594 = vst.msk [vmem:[%s164 + $0x74] sm:$0xf] %vm564, %v529
        %595 = vst.msk [vmem:[%s164 + $0x78] sm:$0xf] %vm564, %v530
        %596 = vst.msk [vmem:[%s164 + $0x7c] sm:$0xf] %vm564, %v531
        %597 = vst.msk [vmem:[%s164 + $0x80] sm:$0xf] %vm564, %v532
        %598 = vst.msk [vmem:[%s164 + $0x84] sm:$0xf] %vm564, %v533
        %599 = vst.msk [vmem:[%s164 + $0x88] sm:$0xf] %vm564, %v534
        %600 = vst.msk [vmem:[%s164 + $0x8c] sm:$0xf] %vm564, %v535
        %601 = vst.msk [vmem:[%s164 + $0x90] sm:$0xf] %vm564, %v536
        %602 = vst.msk [vmem:[%s164 + $0x94] sm:$0xf] %vm564, %v537
        %603 = vst.msk [vmem:[%s164 + $0x98] sm:$0xf] %vm564, %v538
        %604 = vst.msk [vmem:[%s164 + $0x9c] sm:$0xf] %vm564, %v539
        %605 = vst.msk [vmem:[%s164 + $0xa0] sm:$0xf] %vm564, %v540
        %606 = vst.msk [vmem:[%s164 + $0xa4] sm:$0xf] %vm564, %v541
        %607 = vst.msk [vmem:[%s164 + $0xa8] sm:$0xf] %vm564, %v542
        %608 = vst.msk [vmem:[%s164 + $0xac] sm:$0xf] %vm564, %v543
        %609 = vst.msk [vmem:[%s164 + $0xb0] sm:$0xf] %vm564, %v544
        %610 = vst.msk [vmem:[%s164 + $0xb4] sm:$0xf] %vm564, %v545
        %611 = vst.msk [vmem:[%s164 + $0xb8] sm:$0xf] %vm564, %v546
        %612 = vst.msk [vmem:[%s164 + $0xbc] sm:$0xf] %vm564, %v547
        %613 = vst.msk [vmem:[%s164 + $0xc0] sm:$0xf] %vm564, %v548
        %614 = vst.msk [vmem:[%s164 + $0xc4] sm:$0xf] %vm564, %v549
        %615 = vst.msk [vmem:[%s164 + $0xc8] sm:$0xf] %vm564, %v550
        %616 = vst.msk [vmem:[%s164 + $0xcc] sm:$0xf] %vm564, %v551
        %617 = vst.msk [vmem:[%s164 + $0xd0] sm:$0xf] %vm564, %v552
        %618 = vst.msk [vmem:[%s164 + $0xd4] sm:$0xf] %vm564, %v553
        %619 = vst.msk [vmem:[%s164 + $0xd8] sm:$0xf] %vm564, %v554
        %620 = vst.msk [vmem:[%s164 + $0xdc] sm:$0xf] %vm564, %v555
        %621 = vst.msk [vmem:[%s164 + $0xe0] sm:$0xf] %vm564, %v556
        %622 = vst.msk [vmem:[%s164 + $0xe4] sm:$0xf] %vm564, %v557
        %623 = vst.msk [vmem:[%s164 + $0xe8] sm:$0xf] %vm564, %v558
        %624 = vst.msk [vmem:[%s164 + $0xec] sm:$0xf] %vm564, %v559
        %625 = vst.msk [vmem:[%s164 + $0xf0] sm:$0xf] %vm564, %v560
        %626 = vst.msk [vmem:[%s164 + $0xf4] sm:$0xf] %vm564, %v561
        %627 = vst.msk [vmem:[%s164 + $0xf8] sm:$0xf] %vm564, %v562
        %628 = vst.msk [vmem:[%s164 + $0xfc] sm:$0xf] %vm564, %v563
        %s629 = sand.u32 %s93, 1
        %s630 = scalar_lea.sflag [#allocation3], %s629
        %s631 = sand.u32 %s93, 1
        %s632 = smul.addr %s631, 256
        %s633 = scalar_lea.vmem [#allocation2], %s632
        // Predicated region
        $region33: #{conv_bn.3} parent=31 // pred_check
          %p634 = pneg %p103
        $region34: #{conv_bn.3} parent=31 // pred_check_branch
          %636 = sbr.rel (%p634) target = $region36
        $region35: #{conv_bn.3} parent=31 // pred_region
          %s637 = smul.u32 64, %s17
          %639 = vsyncadd %s630, 0
          %s640 = smul.addr %s637, 4
          %s641 = scalar_lea.hbm %s3, %s640
          %s642 = sshll.u32 %s633, 4
          %s643 = int_to_ptr.vmem [resolvable:$true] %s642
          %s644 = sshll.u32 %s641, 4
          %s645 = int_to_ptr.hbm [resolvable:$true] %s644
          %650 = dma.vmem_to_hbm [thread:$0]  %s643, 4096, %s645, %s630, 64, 64, 4
        $region36: #{conv_bn.3} parent=31 // pred_fallthru
          _
      $region32: #{conv_bn.3} parent=5 // pred_fallthru
        _
      %p651 = scmp.le.s32.totalorder 2, %s12
      // Predicated region
      $region37: #{conv_bn.3} parent=5 // pred_check
        %p652 = pneg %p651
      $region38: #{conv_bn.3} parent=5 // pred_check_branch
        %654 = sbr.rel (%p652) target = $region40
      $region39: #{conv_bn.3} parent=5 // pred_region
        %s655 = ssub.s32 %s12, 2
        // Predicated region
        $region41: #{conv_bn.3} parent=39 // pred_check
          %p656 = pneg %p109
        $region42: #{conv_bn.3} parent=39 // pred_check_branch
          %658 = sbr.rel (%p656) target = $region44
        $region43: #{conv_bn.3} parent=39 // pred_region
          %s659 = sand.u32 %s94, 1
          %s660 = scalar_lea.sflag [#allocation3], %s659
          %s661 = sand.u32 %s94, 1
          %s662 = smul.addr %s661, 256
          %s663 = scalar_lea.vmem [#allocation2], %s662
          %665 = dma.done %s660, 4096
        $region44: #{conv_bn.3} parent=39 // pred_fallthru
          _
      $region40: #{conv_bn.3} parent=5 // pred_fallthru
        _
    $region6: #{conv_bn.3} parent=1 // loop_footer
      %s16 = sadd.s32 1, %s12
    $region7: #{conv_bn.3} parent=1 // loop_footer_branch
      %11 = sbr.rel target = $region3
    $region8: #{conv_bn.3} parent=1 // loop_exit
      _
    %666 = vsyncpa [#allocation3], 1
    %s667 = scalar_lea.sflag [#allocation3], 1
    %668 = vsyncpa %s667, 1

// kernel: conv_bn.2
$region0: #{conv_bn.2}
  #allocation0 [shape = 'u32[]', space=smem, size = 0x4, offset = 0x4, fixed_abs, tag = 'smem constant byte address 0x4 - core index']
  #allocation1 [shape = 'u32[72,128]{1,0:T(1,128)}', space=vmem, size = 0x9000, scoped, tag = 'internal scratch']
  %s0 = inlined_call_operand.vmem [shape: bf16[2048,160], index: 0, kind: input, shape index: {}]
  %s1 = inlined_call_operand.vmem [shape: bf16[160,64], index: 1, kind: input, shape index: {}]
  %s2 = inlined_call_operand.vmem [shape: bf16[2048,64], index: 2, kind: output, shape index: {0}]
  %s3 = inlined_call_operand.vmem [shape: f32[4,1,64], index: 3, kind: output, shape index: {1}]
  %s4 = inlined_call_operand.vmem [shape: f32[4,1,64], index: 4, kind: output, shape index: {2}]
  %5 = xla_tuple %s2, %s3, %s4
  %s6 = sld [smem:[#allocation0]]
  $region57: #{conv_bn.2} parent=0
    _
  %s8 = ssub.s32 1, %s6
  %s9 = scalar_select 0, %s8, %s6
  loop: start=0, step=1, limit=6
  $region2: #{conv_bn.2} parent=0 // loop_pre_header
    _
  $region3: #{conv_bn.2} parent=0 // loop_header
    %s11 = sphi 0, %s15
    %p12 = scmp.ge.s32.totalorder %s11, 6
    %s21 = sphi 0, %s23
    %s24 = sphi 0, %s21
    %s25 = sphi 0, %s24
    %s41 = sphi 0, %s25
    %s45 = sphi 0, %s45
    %s47 = sphi 0, %s45
    %s48 = sphi 0, %s47
    %s62 = sphi 0, %s48
    %s68 = sphi 0, %s70
    %s71 = sphi 0, %s68
    %s72 = sphi 0, %s71
    %s88 = sphi 0, %s72
    %s94 = sphi 0, %s96
    %s97 = sphi 0, %s94
    %s98 = sphi 0, %s97
    %s114 = sphi 0, %s98
    %s120 = sphi 0, %s122
    %s123 = sphi 0, %s120
    %s124 = sphi 0, %s123
    %s140 = sphi 0, %s124
  $region4: #{conv_bn.2} parent=0 // loop_header_branch
    %14 = sbr.rel (%p12) target = $region8
  $region5: #{conv_bn.2} parent=0 // loop_body
    %s16 = ssub.s32 %s11, 1
    %s17 = ssub.s32 %s11, 2
    %s18 = sadd.s32 %s11, 1
    %s19 = ssub.s32 %s11, %s18
    %p20 = scmp.eq.s32.totalorder %s19, 0
    %s22 = sadd.s32 %s21, 1
    %s23 = scalar_select %p20, %s21, %s22
    %p26 = pneg %p20
    %p27 = scmp.eq.s32.totalorder %s11, 3
    %p28 = por %p26, %p27
    %p29 = scmp.ne.s32.totalorder %s21, %s24
    %p30 = scmp.eq.s32.totalorder %s11, 0
    %p31 = por %p29, %p30
    %p32 = scmp.ne.s32.totalorder %s21, %s24
    %p33 = scmp.eq.s32.totalorder %s16, 3
    %p34 = por %p32, %p33
    %p35 = scmp.ne.s32.totalorder %s24, %s25
    %p36 = scmp.eq.s32.totalorder %s16, 0
    %p37 = por %p35, %p36
    %p38 = scmp.ne.s32.totalorder %s24, %s25
    %p39 = scmp.eq.s32.totalorder %s17, 3
    %p40 = por %p38, %p39
    %p42 = scmp.ne.s32.totalorder %s25, %s41
    %p43 = scmp.eq.s32.totalorder %s17, 0
    %p44 = por %p42, %p43
    %s46 = sadd.s32 %s45, 1
    %p49 = scmp.eq.s32.totalorder %s11, 3
    %p50 = scmp.ne.s32.totalorder %s45, %s47
    %p51 = scmp.eq.s32.totalorder %s11, 0
    %p52 = por %p50, %p51
    %p53 = scmp.ne.s32.totalorder %s45, %s47
    %p54 = scmp.eq.s32.totalorder %s16, 3
    %p55 = por %p53, %p54
    %p56 = scmp.ne.s32.totalorder %s47, %s48
    %p57 = scmp.eq.s32.totalorder %s16, 0
    %p58 = por %p56, %p57
    %p59 = scmp.ne.s32.totalorder %s47, %s48
    %p60 = scmp.eq.s32.totalorder %s17, 3
    %p61 = por %p59, %p60
    %p63 = scmp.ne.s32.totalorder %s48, %s62
    %p64 = scmp.eq.s32.totalorder %s17, 0
    %p65 = por %p63, %p64
    %s66 = ssub.s32 %s11, %s18
    %p67 = scmp.eq.s32.totalorder %s66, 0
    %s69 = sadd.s32 %s68, 1
    %s70 = scalar_select %p67, %s68, %s69
    %p73 = pneg %p67
    %p74 = scmp.eq.s32.totalorder %s11, 3
    %p75 = por %p73, %p74
    %p76 = scmp.ne.s32.totalorder %s68, %s71
    %p77 = scmp.eq.s32.totalorder %s11, 0
    %p78 = por %p76, %p77
    %p79 = scmp.ne.s32.totalorder %s68, %s71
    %p80 = scmp.eq.s32.totalorder %s16, 3
    %p81 = por %p79, %p80
    %p82 = scmp.ne.s32.totalorder %s71, %s72
    %p83 = scmp.eq.s32.totalorder %s16, 0
    %p84 = por %p82, %p83
    %p85 = scmp.ne.s32.totalorder %s71, %s72
    %p86 = scmp.eq.s32.totalorder %s17, 3
    %p87 = por %p85, %p86
    %p89 = scmp.ne.s32.totalorder %s72, %s88
    %p90 = scmp.eq.s32.totalorder %s17, 0
    %p91 = por %p89, %p90
    %s92 = ssub.s32 %s11, %s18
    %p93 = scmp.eq.s32.totalorder %s92, 0
    %s95 = sadd.s32 %s94, 1
    %s96 = scalar_select %p93, %s94, %s95
    %p99 = pneg %p93
    %p100 = scmp.eq.s32.totalorder %s11, 3
    %p101 = por %p99, %p100
    %p102 = scmp.ne.s32.totalorder %s94, %s97
    %p103 = scmp.eq.s32.totalorder %s11, 0
    %p104 = por %p102, %p103
    %p105 = scmp.ne.s32.totalorder %s94, %s97
    %p106 = scmp.eq.s32.totalorder %s16, 3
    %p107 = por %p105, %p106
    %p108 = scmp.ne.s32.totalorder %s97, %s98
    %p109 = scmp.eq.s32.totalorder %s16, 0
    %p110 = por %p108, %p109
    %p111 = scmp.ne.s32.totalorder %s97, %s98
    %p112 = scmp.eq.s32.totalorder %s17, 3
    %p113 = por %p111, %p112
    %p115 = scmp.ne.s32.totalorder %s98, %s114
    %p116 = scmp.eq.s32.totalorder %s17, 0
    %p117 = por %p115, %p116
    %s118 = ssub.s32 %s11, %s18
    %p119 = scmp.eq.s32.totalorder %s118, 0
    %s121 = sadd.s32 %s120, 1
    %s122 = scalar_select %p119, %s120, %s121
    %p125 = pneg %p119
    %p126 = scmp.eq.s32.totalorder %s11, 3
    %p127 = por %p125, %p126
    %p128 = scmp.ne.s32.totalorder %s120, %s123
    %p129 = scmp.eq.s32.totalorder %s11, 0
    %p130 = por %p128, %p129
    %p131 = scmp.ne.s32.totalorder %s120, %s123
    %p132 = scmp.eq.s32.totalorder %s16, 3
    %p133 = por %p131, %p132
    %p134 = scmp.ne.s32.totalorder %s123, %s124
    %p135 = scmp.eq.s32.totalorder %s16, 0
    %p136 = por %p134, %p135
    %p137 = scmp.ne.s32.totalorder %s123, %s124
    %p138 = scmp.eq.s32.totalorder %s17, 3
    %p139 = por %p137, %p138
    %p141 = scmp.ne.s32.totalorder %s124, %s140
    %p142 = scmp.eq.s32.totalorder %s17, 0
    %p143 = por %p141, %p142
    %p144 = scmp.le.s32.totalorder 1, %s11
    %p145 = scmp.lt.s32.totalorder %s11, 5
    %p146 = pnand %p144, %p145
    %p147 = pneg %p146
    // Predicated region
    $region9: #{conv_bn.2} parent=5 // pred_check
      _
    $region10: #{conv_bn.2} parent=5 // pred_check_branch
      %149 = sbr.rel (%p146) target = $region12
    $region11: #{conv_bn.2} parent=5 // pred_region
      %s150 = ssub.s32 %s11, 1
      // Predicated region
      $region13: #{conv_bn.2} parent=11 // pred_check
        %p151 = pneg %p58
      $region14: #{conv_bn.2} parent=11 // pred_check_branch
        %153 = sbr.rel (%p151) target = $region16
      $region15: #{conv_bn.2} parent=11 // pred_region
        _
      $region16: #{conv_bn.2} parent=11 // pred_fallthru
        _
    $region12: #{conv_bn.2} parent=5 // pred_fallthru
      _
    %p154 = scmp.lt.s32.totalorder %s11, 4
    // Predicated region
    $region17: #{conv_bn.2} parent=5 // pred_check
      %p155 = pneg %p154
    $region18: #{conv_bn.2} parent=5 // pred_check_branch
      %157 = sbr.rel (%p155) target = $region20
    $region19: #{conv_bn.2} parent=5 // pred_region
      // Predicated region
      $region21: #{conv_bn.2} parent=19 // pred_check
        %p158 = pneg %p31
      $region22: #{conv_bn.2} parent=19 // pred_check_branch
        %160 = sbr.rel (%p158) target = $region24
      $region23: #{conv_bn.2} parent=19 // pred_region
        %s161 = smul.u32 64, %s11
        %p162 = scmp.lt.s32.totalorder %s161, 255
        %s163 = scalar_select %p162, %s161, 255
        %s164 = smul.addr %s163, 2
        %s165 = smul.addr %s164, 4
        %s166 = scalar_lea.vmem %s0, %s165
        %s167 = smul.u32 64, %s11
      $region24: #{conv_bn.2} parent=19 // pred_fallthru
        _
    $region20: #{conv_bn.2} parent=5 // pred_fallthru
      _
    %p168 = scmp.le.s32.totalorder 1, %s11
    %p169 = scmp.lt.s32.totalorder %s11, 5
    %p170 = pnand %p168, %p169
    %p171 = pneg %p170
    // Predicated region
    $region25: #{conv_bn.2} parent=5 // pred_check
      _
    $region26: #{conv_bn.2} parent=5 // pred_check_branch
      %173 = sbr.rel (%p170) target = $region28
    $region27: #{conv_bn.2} parent=5 // pred_region
      %s174 = ssub.s32 %s11, 1
      %s175 = smul.u32 64, %s16
      %p176 = scmp.lt.s32.totalorder %s175, 255
      %s177 = scalar_select %p176, %s175, 255
      %s178 = smul.addr %s177, 2
      %s179 = smul.addr %s178, 4
      %s180 = scalar_lea.vmem %s0, %s179
      %p181 = pneg %p37
      %p182 = pneg %p34
      %p183 = pneg %p58
      %p184 = pneg %p55
      %p185 = pneg %p84
      %p186 = pneg %p81
      %s187 = smul.u32 64, %s16
      %p188 = scmp.lt.s32.totalorder %s187, 255
      %s189 = scalar_select %p188, %s187, 255
      %s190 = smul.addr %s189, 4
      %s191 = scalar_lea.vmem %s2, %s190
      %p192 = pneg %p110
      %p193 = pneg %p107
      %p194 = scmp.lt.s32.totalorder %s16, 3
      %s195 = scalar_select %p194, %s16, 3
      %s196 = scalar_lea.vmem %s3, %s195
      %p197 = pneg %p136
      %p198 = pneg %p133
      %p199 = scmp.lt.s32.totalorder %s16, 3
      %s200 = scalar_select %p199, %s16, 3
      %s201 = scalar_lea.vmem %s4, %s200
      %s202 = smul.u32 64, %s16
      %p203 = scmp.lt.s32.totalorder %s202, 255
      %s204 = scalar_select %p203, %s202, 255
      %s205 = smul.addr %s204, 2
      %s206 = smul.addr %s205, 4
      %s207 = scalar_lea.vmem %s0, %s206
      %s208 = smul.u32 64, %s16
      %s209 = smul.u32 64, %s16
      %p210 = scmp.lt.s32.totalorder %s209, 255
      %s211 = scalar_select %p210, %s209, 255
      %s212 = smul.addr %s211, 4
      %s213 = scalar_lea.vmem %s2, %s212
      %s214 = smul.u32 64, %s16
      %p215 = scmp.lt.s32.totalorder %s16, 3
      %s216 = scalar_select %p215, %s16, 3
      %s217 = scalar_lea.vmem %s3, %s216
      %p218 = scmp.lt.s32.totalorder %s16, 3
      %s219 = scalar_select %p218, %s16, 3
      %s220 = scalar_lea.vmem %s4, %s219
      %v222 = vld [vmem:[%s207] sm:$0xff]
      %v223 = vld [vmem:[%s207 + $0x8] sm:$0xff]
      %v224 = vld [vmem:[%s207 + $0x10] sm:$0xff]
      %v225 = vld [vmem:[%s207 + $0x18] sm:$0xff]
      %v226 = vld [vmem:[%s207 + $0x20] sm:$0xff]
      %v227 = vld [vmem:[%s207 + $0x28] sm:$0xff]
      %v228 = vld [vmem:[%s207 + $0x30] sm:$0xff]
      %v229 = vld [vmem:[%s207 + $0x38] sm:$0xff]
      %v230 = vld [vmem:[%s207 + $0x40] sm:$0xff]
      %v231 = vld [vmem:[%s207 + $0x48] sm:$0xff]
      %v232 = vld [vmem:[%s207 + $0x50] sm:$0xff]
      %v233 = vld [vmem:[%s207 + $0x58] sm:$0xff]
      %v234 = vld [vmem:[%s207 + $0x60] sm:$0xff]
      %v235 = vld [vmem:[%s207 + $0x68] sm:$0xff]
      %v236 = vld [vmem:[%s207 + $0x70] sm:$0xff]
      %v237 = vld [vmem:[%s207 + $0x78] sm:$0xff]
      %v238 = vld [vmem:[%s207 + $0x80] sm:$0xff]
      %v239 = vld [vmem:[%s207 + $0x88] sm:$0xff]
      %v240 = vld [vmem:[%s207 + $0x90] sm:$0xff]
      %v241 = vld [vmem:[%s207 + $0x98] sm:$0xff]
      %v242 = vld [vmem:[%s207 + $0xa0] sm:$0xff]
      %v243 = vld [vmem:[%s207 + $0xa8] sm:$0xff]
      %v244 = vld [vmem:[%s207 + $0xb0] sm:$0xff]
      %v245 = vld [vmem:[%s207 + $0xb8] sm:$0xff]
      %v246 = vld [vmem:[%s207 + $0xc0] sm:$0xff]
      %v247 = vld [vmem:[%s207 + $0xc8] sm:$0xff]
      %v248 = vld [vmem:[%s207 + $0xd0] sm:$0xff]
      %v249 = vld [vmem:[%s207 + $0xd8] sm:$0xff]
      %v250 = vld [vmem:[%s207 + $0xe0] sm:$0xff]
      %v251 = vld [vmem:[%s207 + $0xe8] sm:$0xff]
      %v252 = vld [vmem:[%s207 + $0xf0] sm:$0xff]
      %v253 = vld [vmem:[%s207 + $0xf8] sm:$0xff]
      %v254 = vld [vmem:[%s207 + $0x100] sm:$0xff]
      %v255 = vld [vmem:[%s207 + $0x108] sm:$0xff]
      %v256 = vld [vmem:[%s207 + $0x110] sm:$0xff]
      %v257 = vld [vmem:[%s207 + $0x118] sm:$0xff]
      %v258 = vld [vmem:[%s207 + $0x120] sm:$0xff]
      %v259 = vld [vmem:[%s207 + $0x128] sm:$0xff]
      %v260 = vld [vmem:[%s207 + $0x130] sm:$0xff]
      %v261 = vld [vmem:[%s207 + $0x138] sm:$0xff]
      %v262 = vld [vmem:[%s207 + $0x140] sm:$0xff]
      %v263 = vld [vmem:[%s207 + $0x148] sm:$0xff]
      %v264 = vld [vmem:[%s207 + $0x150] sm:$0xff]
      %v265 = vld [vmem:[%s207 + $0x158] sm:$0xff]
      %v266 = vld [vmem:[%s207 + $0x160] sm:$0xff]
      %v267 = vld [vmem:[%s207 + $0x168] sm:$0xff]
      %v268 = vld [vmem:[%s207 + $0x170] sm:$0xff]
      %v269 = vld [vmem:[%s207 + $0x178] sm:$0xff]
      %v270 = vld [vmem:[%s207 + $0x180] sm:$0xff]
      %v271 = vld [vmem:[%s207 + $0x188] sm:$0xff]
      %v272 = vld [vmem:[%s207 + $0x190] sm:$0xff]
      %v273 = vld [vmem:[%s207 + $0x198] sm:$0xff]
      %v274 = vld [vmem:[%s207 + $0x1a0] sm:$0xff]
      %v275 = vld [vmem:[%s207 + $0x1a8] sm:$0xff]
      %v276 = vld [vmem:[%s207 + $0x1b0] sm:$0xff]
      %v277 = vld [vmem:[%s207 + $0x1b8] sm:$0xff]
      %v278 = vld [vmem:[%s207 + $0x1c0] sm:$0xff]
      %v279 = vld [vmem:[%s207 + $0x1c8] sm:$0xff]
      %v280 = vld [vmem:[%s207 + $0x1d0] sm:$0xff]
      %v281 = vld [vmem:[%s207 + $0x1d8] sm:$0xff]
      %v282 = vld [vmem:[%s207 + $0x1e0] sm:$0xff]
      %v283 = vld [vmem:[%s207 + $0x1e8] sm:$0xff]
      %v284 = vld [vmem:[%s207 + $0x1f0] sm:$0xff]
      %v285 = vld [vmem:[%s207 + $0x1f8] sm:$0xff]
      %v286 = vld [vmem:[%s1] sm:$0xf]
      %v287 = vld [vmem:[%s1 + $0x4] sm:$0xf]
      %v288 = vld [vmem:[%s1 + $0x8] sm:$0xf]
      %v289 = vld [vmem:[%s1 + $0xc] sm:$0xf]
      %v290 = vld [vmem:[%s1 + $0x10] sm:$0xf]
      %v291 = vld [vmem:[%s1 + $0x14] sm:$0xf]
      %v292 = vld [vmem:[%s1 + $0x18] sm:$0xf]
      %v293 = vld [vmem:[%s1 + $0x1c] sm:$0xf]
      %v294 = vld [vmem:[%s1 + $0x20] sm:$0xf]
      %v295 = vld [vmem:[%s1 + $0x24] sm:$0xf]
      %v296 = vld [vmem:[%s1 + $0x28] sm:$0xf]
      %v297 = vld [vmem:[%s1 + $0x2c] sm:$0xf]
      %v298 = vld [vmem:[%s1 + $0x30] sm:$0xf]
      %v299 = vld [vmem:[%s1 + $0x34] sm:$0xf]
      %v300 = vld [vmem:[%s1 + $0x38] sm:$0xf]
      %v301 = vld [vmem:[%s1 + $0x3c] sm:$0xf]
      %v302 = vld [vmem:[%s1 + $0x40] sm:$0xf]
      %v303 = vld [vmem:[%s1 + $0x44] sm:$0xf]
      %v304 = vld [vmem:[%s1 + $0x48] sm:$0xf]
      %v305 = vld [vmem:[%s1 + $0x4c] sm:$0xf]
      %v370 = vunpack.c.l.b16 %v222
      %v371 = vunpack.c.h.b16 %v222
      %v372 = vunpack.c.l.b16 %v223
      %v373 = vunpack.c.h.b16 %v223
      %v374 = vunpack.c.l.b16 %v224
      %v375 = vunpack.c.h.b16 %v224
      %v376 = vunpack.c.l.b16 %v225
      %v377 = vunpack.c.h.b16 %v225
      %v378 = vunpack.c.l.b16 %v226
      %v379 = vunpack.c.h.b16 %v226
      %v380 = vunpack.c.l.b16 %v227
      %v381 = vunpack.c.h.b16 %v227
      %v382 = vunpack.c.l.b16 %v228
      %v383 = vunpack.c.h.b16 %v228
      %v384 = vunpack.c.l.b16 %v229
      %v385 = vunpack.c.h.b16 %v229
      %v386 = vunpack.c.l.b16 %v230
      %v387 = vunpack.c.h.b16 %v230
      %v388 = vunpack.c.l.b16 %v231
      %v389 = vunpack.c.h.b16 %v231
      %v390 = vunpack.c.l.b16 %v232
      %v391 = vunpack.c.h.b16 %v232
      %v392 = vunpack.c.l.b16 %v233
      %v393 = vunpack.c.h.b16 %v233
      %v394 = vunpack.c.l.b16 %v234
      %v395 = vunpack.c.h.b16 %v234
      %v396 = vunpack.c.l.b16 %v235
      %v397 = vunpack.c.h.b16 %v235
      %v398 = vunpack.c.l.b16 %v236
      %v399 = vunpack.c.h.b16 %v236
      %v400 = vunpack.c.l.b16 %v237
      %v401 = vunpack.c.h.b16 %v237
      %v402 = vunpack.c.l.b16 %v238
      %v403 = vunpack.c.h.b16 %v238
      %v404 = vunpack.c.l.b16 %v239
      %v405 = vunpack.c.h.b16 %v239
      %v406 = vunpack.c.l.b16 %v240
      %v407 = vunpack.c.h.b16 %v240
      %v408 = vunpack.c.l.b16 %v241
      %v409 = vunpack.c.h.b16 %v241
      %v410 = vunpack.c.l.b16 %v242
      %v411 = vunpack.c.h.b16 %v242
      %v412 = vunpack.c.l.b16 %v243
      %v413 = vunpack.c.h.b16 %v243
      %v414 = vunpack.c.l.b16 %v244
      %v415 = vunpack.c.h.b16 %v244
      %v416 = vunpack.c.l.b16 %v245
      %v417 = vunpack.c.h.b16 %v245
      %v418 = vunpack.c.l.b16 %v246
      %v419 = vunpack.c.h.b16 %v246
      %v420 = vunpack.c.l.b16 %v247
      %v421 = vunpack.c.h.b16 %v247
      %v422 = vunpack.c.l.b16 %v248
      %v423 = vunpack.c.h.b16 %v248
      %v424 = vunpack.c.l.b16 %v249
      %v425 = vunpack.c.h.b16 %v249
      %v426 = vunpack.c.l.b16 %v250
      %v427 = vunpack.c.h.b16 %v250
      %v428 = vunpack.c.l.b16 %v251
      %v429 = vunpack.c.h.b16 %v251
      %v430 = vunpack.c.l.b16 %v252
      %v431 = vunpack.c.h.b16 %v252
      %v432 = vunpack.c.l.b16 %v253
      %v433 = vunpack.c.h.b16 %v253
      %v434 = vunpack.c.l.b16 %v254
      %v435 = vunpack.c.h.b16 %v254
      %v436 = vunpack.c.l.b16 %v255
      %v437 = vunpack.c.h.b16 %v255
      %v438 = vunpack.c.l.b16 %v256
      %v439 = vunpack.c.h.b16 %v256
      %v440 = vunpack.c.l.b16 %v257
      %v441 = vunpack.c.h.b16 %v257
      %v442 = vunpack.c.l.b16 %v258
      %v443 = vunpack.c.h.b16 %v258
      %v444 = vunpack.c.l.b16 %v259
      %v445 = vunpack.c.h.b16 %v259
      %v446 = vunpack.c.l.b16 %v260
      %v447 = vunpack.c.h.b16 %v260
      %v448 = vunpack.c.l.b16 %v261
      %v449 = vunpack.c.h.b16 %v261
      %v450 = vunpack.c.l.b16 %v262
      %v451 = vunpack.c.h.b16 %v262
      %v452 = vunpack.c.l.b16 %v263
      %v453 = vunpack.c.h.b16 %v263
      %v454 = vunpack.c.l.b16 %v264
      %v455 = vunpack.c.h.b16 %v264
      %v456 = vunpack.c.l.b16 %v265
      %v457 = vunpack.c.h.b16 %v265
      %v458 = vunpack.c.l.b16 %v266
      %v459 = vunpack.c.h.b16 %v266
      %v460 = vunpack.c.l.b16 %v267
      %v461 = vunpack.c.h.b16 %v267
      %v462 = vunpack.c.l.b16 %v268
      %v463 = vunpack.c.h.b16 %v268
      %v464 = vunpack.c.l.b16 %v269
      %v465 = vunpack.c.h.b16 %v269
      %v466 = vunpack.c.l.b16 %v270
      %v467 = vunpack.c.h.b16 %v270
      %v468 = vunpack.c.l.b16 %v271
      %v469 = vunpack.c.h.b16 %v271
      %v470 = vunpack.c.l.b16 %v272
      %v471 = vunpack.c.h.b16 %v272
      %v472 = vunpack.c.l.b16 %v273
      %v473 = vunpack.c.h.b16 %v273
      %v474 = vunpack.c.l.b16 %v274
      %v475 = vunpack.c.h.b16 %v274
      %v476 = vunpack.c.l.b16 %v275
      %v477 = vunpack.c.h.b16 %v275
      %v478 = vunpack.c.l.b16 %v276
      %v479 = vunpack.c.h.b16 %v276
      %v480 = vunpack.c.l.b16 %v277
      %v481 = vunpack.c.h.b16 %v277
      %v482 = vunpack.c.l.b16 %v278
      %v483 = vunpack.c.h.b16 %v278
      %v484 = vunpack.c.l.b16 %v279
      %v485 = vunpack.c.h.b16 %v279
      %v486 = vunpack.c.l.b16 %v280
      %v487 = vunpack.c.h.b16 %v280
      %v488 = vunpack.c.l.b16 %v281
      %v489 = vunpack.c.h.b16 %v281
      %v490 = vunpack.c.l.b16 %v282
      %v491 = vunpack.c.h.b16 %v282
      %v492 = vunpack.c.l.b16 %v283
      %v493 = vunpack.c.h.b16 %v283
      %v494 = vunpack.c.l.b16 %v284
      %v495 = vunpack.c.h.b16 %v284
      %v496 = vunpack.c.l.b16 %v285
      %v497 = vunpack.c.h.b16 %v285
      %v498 = vpack.c.b16 %v372, %v370
      %v499 = vpack.c.b16 %v373, %v371
      %v500 = vpack.c.b16 %v376, %v374
      %v501 = vpack.c.b16 %v377, %v375
      %v502 = vpack.c.b16 %v380, %v378
      %v503 = vpack.c.b16 %v381, %v379
      %v504 = vpack.c.b16 %v384, %v382
      %v505 = vpack.c.b16 %v385, %v383
      %v506 = vpack.c.b16 %v388, %v386
      %v507 = vpack.c.b16 %v389, %v387
      %v508 = vpack.c.b16 %v392, %v390
      %v509 = vpack.c.b16 %v393, %v391
      %v510 = vpack.c.b16 %v396, %v394
      %v511 = vpack.c.b16 %v397, %v395
      %v512 = vpack.c.b16 %v400, %v398
      %v513 = vpack.c.b16 %v401, %v399
      %v514 = vpack.c.b16 %v404, %v402
      %v515 = vpack.c.b16 %v405, %v403
      %v516 = vpack.c.b16 %v408, %v406
      %v517 = vpack.c.b16 %v409, %v407
      %v518 = vpack.c.b16 %v412, %v410
      %v519 = vpack.c.b16 %v413, %v411
      %v520 = vpack.c.b16 %v416, %v414
      %v521 = vpack.c.b16 %v417, %v415
      %v522 = vpack.c.b16 %v420, %v418
      %v523 = vpack.c.b16 %v421, %v419
      %v524 = vpack.c.b16 %v424, %v422
      %v525 = vpack.c.b16 %v425, %v423
      %v526 = vpack.c.b16 %v428, %v426
      %v527 = vpack.c.b16 %v429, %v427
      %v528 = vpack.c.b16 %v432, %v430
      %v529 = vpack.c.b16 %v433, %v431
      %v530 = vpack.c.b16 %v436, %v434
      %v531 = vpack.c.b16 %v437, %v435
      %v532 = vpack.c.b16 %v440, %v438
      %v533 = vpack.c.b16 %v441, %v439
      %v534 = vpack.c.b16 %v444, %v442
      %v535 = vpack.c.b16 %v445, %v443
      %v536 = vpack.c.b16 %v448, %v446
      %v537 = vpack.c.b16 %v449, %v447
      %v538 = vpack.c.b16 %v452, %v450
      %v539 = vpack.c.b16 %v453, %v451
      %v540 = vpack.c.b16 %v456, %v454
      %v541 = vpack.c.b16 %v457, %v455
      %v542 = vpack.c.b16 %v460, %v458
      %v543 = vpack.c.b16 %v461, %v459
      %v544 = vpack.c.b16 %v464, %v462
      %v545 = vpack.c.b16 %v465, %v463
      %v546 = vpack.c.b16 %v468, %v466
      %v547 = vpack.c.b16 %v469, %v467
      %v548 = vpack.c.b16 %v472, %v470
      %v549 = vpack.c.b16 %v473, %v471
      %v550 = vpack.c.b16 %v476, %v474
      %v551 = vpack.c.b16 %v477, %v475
      %v552 = vpack.c.b16 %v480, %v478
      %v553 = vpack.c.b16 %v481, %v479
      %v554 = vpack.c.b16 %v484, %v482
      %v555 = vpack.c.b16 %v485, %v483
      %v556 = vpack.c.b16 %v488, %v486
      %v557 = vpack.c.b16 %v489, %v487
      %v558 = vpack.c.b16 %v492, %v490
      %v559 = vpack.c.b16 %v493, %v491
      %v560 = vpack.c.b16 %v496, %v494
      %v561 = vpack.c.b16 %v497, %v495
      %v614 = vunpack.c.l.b16 %v286
      %v615 = vunpack.c.l.b16 %v287
      %v616 = vunpack.c.l.b16 %v288
      %v617 = vunpack.c.l.b16 %v289
      %v618 = vunpack.c.l.b16 %v290
      %v619 = vunpack.c.l.b16 %v291
      %v620 = vunpack.c.l.b16 %v292
      %v621 = vunpack.c.l.b16 %v293
      %v622 = vunpack.c.l.b16 %v294
      %v623 = vunpack.c.l.b16 %v295
      %v624 = vunpack.c.l.b16 %v296
      %v625 = vunpack.c.l.b16 %v297
      %v626 = vunpack.c.l.b16 %v298
      %v627 = vunpack.c.l.b16 %v299
      %v628 = vunpack.c.l.b16 %v300
      %v629 = vunpack.c.l.b16 %v301
      %v630 = vunpack.c.l.b16 %v302
      %v631 = vunpack.c.l.b16 %v303
      %v632 = vunpack.c.l.b16 %v304
      %v633 = vunpack.c.l.b16 %v305
      %v634 = vpack.c.b16 %v615, %v614
      %v635 = vpack.c.b16 %v617, %v616
      %v636 = vpack.c.b16 %v619, %v618
      %v637 = vpack.c.b16 %v621, %v620
      %v638 = vpack.c.b16 %v623, %v622
      %v639 = vpack.c.b16 %v625, %v624
      %v640 = vpack.c.b16 %v627, %v626
      %v641 = vpack.c.b16 %v629, %v628
      %v642 = vpack.c.b16 %v631, %v630
      %v643 = vpack.c.b16 %v633, %v632
      %vm654 = vcmask 261120
      %v656 = vsel %vm654, %v499, 0
      %v659 = vsel %vm654, %v501, 0
      %v662 = vsel %vm654, %v503, 0
      %v665 = vsel %vm654, %v505, 0
      %v668 = vsel %vm654, %v507, 0
      %v671 = vsel %vm654, %v509, 0
      %v674 = vsel %vm654, %v511, 0
      %v677 = vsel %vm654, %v513, 0
      %v680 = vsel %vm654, %v515, 0
      %v683 = vsel %vm654, %v517, 0
      %v686 = vsel %vm654, %v519, 0
      %v689 = vsel %vm654, %v521, 0
      %v692 = vsel %vm654, %v523, 0
      %v695 = vsel %vm654, %v525, 0
      %v698 = vsel %vm654, %v527, 0
      %v701 = vsel %vm654, %v529, 0
      %v704 = vsel %vm654, %v531, 0
      %v707 = vsel %vm654, %v533, 0
      %v710 = vsel %vm654, %v535, 0
      %v713 = vsel %vm654, %v537, 0
      %v716 = vsel %vm654, %v539, 0
      %v719 = vsel %vm654, %v541, 0
      %v722 = vsel %vm654, %v543, 0
      %v725 = vsel %vm654, %v545, 0
      %v728 = vsel %vm654, %v547, 0
      %v731 = vsel %vm654, %v549, 0
      %v734 = vsel %vm654, %v551, 0
      %v737 = vsel %vm654, %v553, 0
      %v740 = vsel %vm654, %v555, 0
      %v743 = vsel %vm654, %v557, 0
      %v746 = vsel %vm654, %v559, 0
      %v749 = vsel %vm654, %v561, 0
      %751 = vmatpush.bf16.msra.mxu0 %v641
      %752 = vmatpush.bf16.msra.mxu0 %v640
      %753 = vmatpush.bf16.msra.mxu0 %v639
      %754 = vmatpush.bf16.msra.mxu0 %v638
      %755 = vmatpush.bf16.msra.mxu0 %v637
      %756 = vmatpush.bf16.msra.mxu0 %v636
      %757 = vmatpush.bf16.msra.mxu0 %v635
      %758 = vmatpush.bf16.msra.mxu0 %v634
      %759 = vmatmul.bf16.gmra.mxu0 %v498
      %v760 = vpop.f32.mrf.mxu0
      %v761 = vadd.f32 0.0, %v760
      %v762 = vpop.f32.mrf.mxu0
      %v763 = vadd.f32 0.0, %v762
      %764 = vmatmul.bf16.gmra.mxu0 %v500
      %v765 = vpop.f32.mrf.mxu0
      %v766 = vadd.f32 0.0, %v765
      %v767 = vpop.f32.mrf.mxu0
      %v768 = vadd.f32 0.0, %v767
      %769 = vmatmul.bf16.gmra.mxu0 %v502
      %v770 = vpop.f32.mrf.mxu0
      %v771 = vadd.f32 0.0, %v770
      %v772 = vpop.f32.mrf.mxu0
      %v773 = vadd.f32 0.0, %v772
      %774 = vmatmul.bf16.gmra.mxu0 %v504
      %v775 = vpop.f32.mrf.mxu0
      %v776 = vadd.f32 0.0, %v775
      %v777 = vpop.f32.mrf.mxu0
      %v778 = vadd.f32 0.0, %v777
      %779 = vmatmul.bf16.gmra.mxu0 %v506
      %v780 = vpop.f32.mrf.mxu0
      %v781 = vadd.f32 0.0, %v780
      %v782 = vpop.f32.mrf.mxu0
      %v783 = vadd.f32 0.0, %v782
      %784 = vmatmul.bf16.gmra.mxu0 %v508
      %v785 = vpop.f32.mrf.mxu0
      %v786 = vadd.f32 0.0, %v785
      %v787 = vpop.f32.mrf.mxu0
      %v788 = vadd.f32 0.0, %v787
      %789 = vmatmul.bf16.gmra.mxu0 %v510
      %v790 = vpop.f32.mrf.mxu0
      %v791 = vadd.f32 0.0, %v790
      %v792 = vpop.f32.mrf.mxu0
      %v793 = vadd.f32 0.0, %v792
      %794 = vmatmul.bf16.gmra.mxu0 %v512
      %v795 = vpop.f32.mrf.mxu0
      %v796 = vadd.f32 0.0, %v795
      %v797 = vpop.f32.mrf.mxu0
      %v798 = vadd.f32 0.0, %v797
      %799 = vmatmul.bf16.gmra.mxu0 %v514
      %v800 = vpop.f32.mrf.mxu0
      %v801 = vadd.f32 0.0, %v800
      %v802 = vpop.f32.mrf.mxu0
      %v803 = vadd.f32 0.0, %v802
      %804 = vmatmul.bf16.gmra.mxu0 %v516
      %v805 = vpop.f32.mrf.mxu0
      %v806 = vadd.f32 0.0, %v805
      %v807 = vpop.f32.mrf.mxu0
      %v808 = vadd.f32 0.0, %v807
      %809 = vmatmul.bf16.gmra.mxu0 %v518
      %v810 = vpop.f32.mrf.mxu0
      %v811 = vadd.f32 0.0, %v810
      %v812 = vpop.f32.mrf.mxu0
      %v813 = vadd.f32 0.0, %v812
      %814 = vmatmul.bf16.gmra.mxu0 %v520
      %v815 = vpop.f32.mrf.mxu0
      %v816 = vadd.f32 0.0, %v815
      %v817 = vpop.f32.mrf.mxu0
      %v818 = vadd.f32 0.0, %v817
      %819 = vmatmul.bf16.gmra.mxu0 %v522
      %v820 = vpop.f32.mrf.mxu0
      %v821 = vadd.f32 0.0, %v820
      %v822 = vpop.f32.mrf.mxu0
      %v823 = vadd.f32 0.0, %v822
      %824 = vmatmul.bf16.gmra.mxu0 %v524
      %v825 = vpop.f32.mrf.mxu0
      %v826 = vadd.f32 0.0, %v825
      %v827 = vpop.f32.mrf.mxu0
      %v828 = vadd.f32 0.0, %v827
      %829 = vmatmul.bf16.gmra.mxu0 %v526
      %v830 = vpop.f32.mrf.mxu0
      %v831 = vadd.f32 0.0, %v830
      %v832 = vpop.f32.mrf.mxu0
      %v833 = vadd.f32 0.0, %v832
      %834 = vmatmul.bf16.gmra.mxu0 %v528
      %v835 = vpop.f32.mrf.mxu0
      %v836 = vadd.f32 0.0, %v835
      %v837 = vpop.f32.mrf.mxu0
      %v838 = vadd.f32 0.0, %v837
      %839 = vmatmul.bf16.gmra.mxu0 %v530
      %v840 = vpop.f32.mrf.mxu0
      %v841 = vadd.f32 0.0, %v840
      %v842 = vpop.f32.mrf.mxu0
      %v843 = vadd.f32 0.0, %v842
      %844 = vmatmul.bf16.gmra.mxu0 %v532
      %v845 = vpop.f32.mrf.mxu0
      %v846 = vadd.f32 0.0, %v845
      %v847 = vpop.f32.mrf.mxu0
      %v848 = vadd.f32 0.0, %v847
      %849 = vmatmul.bf16.gmra.mxu0 %v534
      %v850 = vpop.f32.mrf.mxu0
      %v851 = vadd.f32 0.0, %v850
      %v852 = vpop.f32.mrf.mxu0
      %v853 = vadd.f32 0.0, %v852
      %854 = vmatmul.bf16.gmra.mxu0 %v536
      %v855 = vpop.f32.mrf.mxu0
      %v856 = vadd.f32 0.0, %v855
      %v857 = vpop.f32.mrf.mxu0
      %v858 = vadd.f32 0.0, %v857
      %859 = vmatmul.bf16.gmra.mxu0 %v538
      %v860 = vpop.f32.mrf.mxu0
      %v861 = vadd.f32 0.0, %v860
      %v862 = vpop.f32.mrf.mxu0
      %v863 = vadd.f32 0.0, %v862
      %864 = vmatmul.bf16.gmra.mxu0 %v540
      %v865 = vpop.f32.mrf.mxu0
      %v866 = vadd.f32 0.0, %v865
      %v867 = vpop.f32.mrf.mxu0
      %v868 = vadd.f32 0.0, %v867
      %869 = vmatmul.bf16.gmra.mxu0 %v542
      %v870 = vpop.f32.mrf.mxu0
      %v871 = vadd.f32 0.0, %v870
      %v872 = vpop.f32.mrf.mxu0
      %v873 = vadd.f32 0.0, %v872
      %874 = vmatmul.bf16.gmra.mxu0 %v544
      %v875 = vpop.f32.mrf.mxu0
      %v876 = vadd.f32 0.0, %v875
      %v877 = vpop.f32.mrf.mxu0
      %v878 = vadd.f32 0.0, %v877
      %879 = vmatmul.bf16.gmra.mxu0 %v546
      %v880 = vpop.f32.mrf.mxu0
      %v881 = vadd.f32 0.0, %v880
      %v882 = vpop.f32.mrf.mxu0
      %v883 = vadd.f32 0.0, %v882
      %884 = vmatmul.bf16.gmra.mxu0 %v548
      %v885 = vpop.f32.mrf.mxu0
      %v886 = vadd.f32 0.0, %v885
      %v887 = vpop.f32.mrf.mxu0
      %v888 = vadd.f32 0.0, %v887
      %889 = vmatmul.bf16.gmra.mxu0 %v550
      %v890 = vpop.f32.mrf.mxu0
      %v891 = vadd.f32 0.0, %v890
      %v892 = vpop.f32.mrf.mxu0
      %v893 = vadd.f32 0.0, %v892
      %894 = vmatmul.bf16.gmra.mxu0 %v552
      %v895 = vpop.f32.mrf.mxu0
      %v896 = vadd.f32 0.0, %v895
      %v897 = vpop.f32.mrf.mxu0
      %v898 = vadd.f32 0.0, %v897
      %899 = vmatmul.bf16.gmra.mxu0 %v554
      %v900 = vpop.f32.mrf.mxu0
      %v901 = vadd.f32 0.0, %v900
      %v902 = vpop.f32.mrf.mxu0
      %v903 = vadd.f32 0.0, %v902
      %904 = vmatmul.bf16.gmra.mxu0 %v556
      %v905 = vpop.f32.mrf.mxu0
      %v906 = vadd.f32 0.0, %v905
      %v907 = vpop.f32.mrf.mxu0
      %v908 = vadd.f32 0.0, %v907
      %909 = vmatmul.bf16.gmra.mxu0 %v558
      %v910 = vpop.f32.mrf.mxu0
      %v911 = vadd.f32 0.0, %v910
      %v912 = vpop.f32.mrf.mxu0
      %v913 = vadd.f32 0.0, %v912
      %914 = vmatmul.bf16.gmra.mxu0 %v560
      %v915 = vpop.f32.mrf.mxu0
      %v916 = vadd.f32 0.0, %v915
      %v917 = vpop.f32.mrf.mxu0
      %v918 = vadd.f32 0.0, %v917
      %919 = vdwg.mxu0
      %920 = vmatpush.bf16.msra.mxu0 0
      %921 = vmatpush.bf16.msra.mxu0 0
      %922 = vmatpush.bf16.msra.mxu0 0
      %923 = vmatpush.bf16.msra.mxu0 0
      %924 = vmatpush.bf16.msra.mxu0 0
      %925 = vmatpush.bf16.msra.mxu0 0
      %926 = vmatpush.bf16.msra.mxu0 %v643
      %927 = vmatpush.bf16.msra.mxu0 %v642
      %928 = vmatmul.bf16.gmra.mxu0 %v656
      %v929 = vpop.f32.mrf.mxu0
      %v930 = vadd.f32 %v761, %v929
      %v931 = vpop.f32.mrf.mxu0
      %v932 = vadd.f32 %v763, %v931
      %933 = vmatmul.bf16.gmra.mxu0 %v659
      %v934 = vpop.f32.mrf.mxu0
      %v935 = vadd.f32 %v766, %v934
      %v936 = vpop.f32.mrf.mxu0
      %v937 = vadd.f32 %v768, %v936
      %938 = vmatmul.bf16.gmra.mxu0 %v662
      %v939 = vpop.f32.mrf.mxu0
      %v940 = vadd.f32 %v771, %v939
      %v941 = vpop.f32.mrf.mxu0
      %v942 = vadd.f32 %v773, %v941
      %943 = vmatmul.bf16.gmra.mxu0 %v665
      %v944 = vpop.f32.mrf.mxu0
      %v945 = vadd.f32 %v776, %v944
      %v946 = vpop.f32.mrf.mxu0
      %v947 = vadd.f32 %v778, %v946
      %948 = vmatmul.bf16.gmra.mxu0 %v668
      %v949 = vpop.f32.mrf.mxu0
      %v950 = vadd.f32 %v781, %v949
      %v951 = vpop.f32.mrf.mxu0
      %v952 = vadd.f32 %v783, %v951
      %953 = vmatmul.bf16.gmra.mxu0 %v671
      %v954 = vpop.f32.mrf.mxu0
      %v955 = vadd.f32 %v786, %v954
      %v956 = vpop.f32.mrf.mxu0
      %v957 = vadd.f32 %v788, %v956
      %958 = vmatmul.bf16.gmra.mxu0 %v674
      %v959 = vpop.f32.mrf.mxu0
      %v960 = vadd.f32 %v791, %v959
      %v961 = vpop.f32.mrf.mxu0
      %v962 = vadd.f32 %v793, %v961
      %963 = vmatmul.bf16.gmra.mxu0 %v677
      %v964 = vpop.f32.mrf.mxu0
      %v965 = vadd.f32 %v796, %v964
      %v966 = vpop.f32.mrf.mxu0
      %v967 = vadd.f32 %v798, %v966
      %968 = vmatmul.bf16.gmra.mxu0 %v680
      %v969 = vpop.f32.mrf.mxu0
      %v970 = vadd.f32 %v801, %v969
      %v971 = vpop.f32.mrf.mxu0
      %v972 = vadd.f32 %v803, %v971
      %973 = vmatmul.bf16.gmra.mxu0 %v683
      %v974 = vpop.f32.mrf.mxu0
      %v975 = vadd.f32 %v806, %v974
      %v976 = vpop.f32.mrf.mxu0
      %v977 = vadd.f32 %v808, %v976
      %978 = vmatmul.bf16.gmra.mxu0 %v686
      %v979 = vpop.f32.mrf.mxu0
      %v980 = vadd.f32 %v811, %v979
      %v981 = vpop.f32.mrf.mxu0
      %v982 = vadd.f32 %v813, %v981
      %983 = vmatmul.bf16.gmra.mxu0 %v689
      %v984 = vpop.f32.mrf.mxu0
      %v985 = vadd.f32 %v816, %v984
      %v986 = vpop.f32.mrf.mxu0
      %v987 = vadd.f32 %v818, %v986
      %988 = vmatmul.bf16.gmra.mxu0 %v692
      %v989 = vpop.f32.mrf.mxu0
      %v990 = vadd.f32 %v821, %v989
      %v991 = vpop.f32.mrf.mxu0
      %v992 = vadd.f32 %v823, %v991
      %993 = vmatmul.bf16.gmra.mxu0 %v695
      %v994 = vpop.f32.mrf.mxu0
      %v995 = vadd.f32 %v826, %v994
      %v996 = vpop.f32.mrf.mxu0
      %v997 = vadd.f32 %v828, %v996
      %998 = vmatmul.bf16.gmra.mxu0 %v698
      %v999 = vpop.f32.mrf.mxu0
      %v1000 = vadd.f32 %v831, %v999
      %v1001 = vpop.f32.mrf.mxu0
      %v1002 = vadd.f32 %v833, %v1001
      %1003 = vmatmul.bf16.gmra.mxu0 %v701
      %v1004 = vpop.f32.mrf.mxu0
      %v1005 = vadd.f32 %v836, %v1004
      %v1006 = vpop.f32.mrf.mxu0
      %v1007 = vadd.f32 %v838, %v1006
      %1008 = vmatmul.bf16.gmra.mxu0 %v704
      %v1009 = vpop.f32.mrf.mxu0
      %v1010 = vadd.f32 %v841, %v1009
      %v1011 = vpop.f32.mrf.mxu0
      %v1012 = vadd.f32 %v843, %v1011
      %1013 = vmatmul.bf16.gmra.mxu0 %v707
      %v1014 = vpop.f32.mrf.mxu0
      %v1015 = vadd.f32 %v846, %v1014
      %v1016 = vpop.f32.mrf.mxu0
      %v1017 = vadd.f32 %v848, %v1016
      %1018 = vmatmul.bf16.gmra.mxu0 %v710
      %v1019 = vpop.f32.mrf.mxu0
      %v1020 = vadd.f32 %v851, %v1019
      %v1021 = vpop.f32.mrf.mxu0
      %v1022 = vadd.f32 %v853, %v1021
      %1023 = vmatmul.bf16.gmra.mxu0 %v713
      %v1024 = vpop.f32.mrf.mxu0
      %v1025 = vadd.f32 %v856, %v1024
      %v1026 = vpop.f32.mrf.mxu0
      %v1027 = vadd.f32 %v858, %v1026
      %1028 = vmatmul.bf16.gmra.mxu0 %v716
      %v1029 = vpop.f32.mrf.mxu0
      %v1030 = vadd.f32 %v861, %v1029
      %v1031 = vpop.f32.mrf.mxu0
      %v1032 = vadd.f32 %v863, %v1031
      %1033 = vmatmul.bf16.gmra.mxu0 %v719
      %v1034 = vpop.f32.mrf.mxu0
      %v1035 = vadd.f32 %v866, %v1034
      %v1036 = vpop.f32.mrf.mxu0
      %v1037 = vadd.f32 %v868, %v1036
      %1038 = vmatmul.bf16.gmra.mxu0 %v722
      %v1039 = vpop.f32.mrf.mxu0
      %v1040 = vadd.f32 %v871, %v1039
      %v1041 = vpop.f32.mrf.mxu0
      %v1042 = vadd.f32 %v873, %v1041
      %1043 = vmatmul.bf16.gmra.mxu0 %v725
      %v1044 = vpop.f32.mrf.mxu0
      %v1045 = vadd.f32 %v876, %v1044
      %v1046 = vpop.f32.mrf.mxu0
      %v1047 = vadd.f32 %v878, %v1046
      %1048 = vmatmul.bf16.gmra.mxu0 %v728
      %v1049 = vpop.f32.mrf.mxu0
      %v1050 = vadd.f32 %v881, %v1049
      %v1051 = vpop.f32.mrf.mxu0
      %v1052 = vadd.f32 %v883, %v1051
      %1053 = vmatmul.bf16.gmra.mxu0 %v731
      %v1054 = vpop.f32.mrf.mxu0
      %v1055 = vadd.f32 %v886, %v1054
      %v1056 = vpop.f32.mrf.mxu0
      %v1057 = vadd.f32 %v888, %v1056
      %1058 = vmatmul.bf16.gmra.mxu0 %v734
      %v1059 = vpop.f32.mrf.mxu0
      %v1060 = vadd.f32 %v891, %v1059
      %v1061 = vpop.f32.mrf.mxu0
      %v1062 = vadd.f32 %v893, %v1061
      %1063 = vmatmul.bf16.gmra.mxu0 %v737
      %v1064 = vpop.f32.mrf.mxu0
      %v1065 = vadd.f32 %v896, %v1064
      %v1066 = vpop.f32.mrf.mxu0
      %v1067 = vadd.f32 %v898, %v1066
      %1068 = vmatmul.bf16.gmra.mxu0 %v740
      %v1069 = vpop.f32.mrf.mxu0
      %v1070 = vadd.f32 %v901, %v1069
      %v1071 = vpop.f32.mrf.mxu0
      %v1072 = vadd.f32 %v903, %v1071
      %1073 = vmatmul.bf16.gmra.mxu0 %v743
      %v1074 = vpop.f32.mrf.mxu0
      %v1075 = vadd.f32 %v906, %v1074
      %v1076 = vpop.f32.mrf.mxu0
      %v1077 = vadd.f32 %v908, %v1076
      %1078 = vmatmul.bf16.gmra.mxu0 %v746
      %v1079 = vpop.f32.mrf.mxu0
      %v1080 = vadd.f32 %v911, %v1079
      %v1081 = vpop.f32.mrf.mxu0
      %v1082 = vadd.f32 %v913, %v1081
      %1083 = vmatmul.bf16.gmra.mxu0 %v749
      %v1084 = vpop.f32.mrf.mxu0
      %v1085 = vadd.f32 %v916, %v1084
      %v1086 = vpop.f32.mrf.mxu0
      %v1087 = vadd.f32 %v918, %v1086
      %1088 = vdwg.mxu0
      %v1089 = vpack.c.bf16 %v930, %v930
      %v1090 = vpack.c.bf16 %v932, %v932
      %v1091 = vpack.c.bf16 %v935, %v935
      %v1092 = vpack.c.bf16 %v937, %v937
      %v1093 = vpack.c.bf16 %v940, %v940
      %v1094 = vpack.c.bf16 %v942, %v942
      %v1095 = vpack.c.bf16 %v945, %v945
      %v1096 = vpack.c.bf16 %v947, %v947
      %v1097 = vpack.c.bf16 %v950, %v950
      %v1098 = vpack.c.bf16 %v952, %v952
      %v1099 = vpack.c.bf16 %v955, %v955
      %v1100 = vpack.c.bf16 %v957, %v957
      %v1101 = vpack.c.bf16 %v960, %v960
      %v1102 = vpack.c.bf16 %v962, %v962
      %v1103 = vpack.c.bf16 %v965, %v965
      %v1104 = vpack.c.bf16 %v967, %v967
      %v1105 = vpack.c.bf16 %v970, %v970
      %v1106 = vpack.c.bf16 %v972, %v972
      %v1107 = vpack.c.bf16 %v975, %v975
      %v1108 = vpack.c.bf16 %v977, %v977
      %v1109 = vpack.c.bf16 %v980, %v980
      %v1110 = vpack.c.bf16 %v982, %v982
      %v1111 = vpack.c.bf16 %v985, %v985
      %v1112 = vpack.c.bf16 %v987, %v987
      %v1113 = vpack.c.bf16 %v990, %v990
      %v1114 = vpack.c.bf16 %v992, %v992
      %v1115 = vpack.c.bf16 %v995, %v995
      %v1116 = vpack.c.bf16 %v997, %v997
      %v1117 = vpack.c.bf16 %v1000, %v1000
      %v1118 = vpack.c.bf16 %v1002, %v1002
      %v1119 = vpack.c.bf16 %v1005, %v1005
      %v1120 = vpack.c.bf16 %v1007, %v1007
      %v1121 = vpack.c.bf16 %v1010, %v1010
      %v1122 = vpack.c.bf16 %v1012, %v1012
      %v1123 = vpack.c.bf16 %v1015, %v1015
      %v1124 = vpack.c.bf16 %v1017, %v1017
      %v1125 = vpack.c.bf16 %v1020, %v1020
      %v1126 = vpack.c.bf16 %v1022, %v1022
      %v1127 = vpack.c.bf16 %v1025, %v1025
      %v1128 = vpack.c.bf16 %v1027, %v1027
      %v1129 = vpack.c.bf16 %v1030, %v1030
      %v1130 = vpack.c.bf16 %v1032, %v1032
      %v1131 = vpack.c.bf16 %v1035, %v1035
      %v1132 = vpack.c.bf16 %v1037, %v1037
      %v1133 = vpack.c.bf16 %v1040, %v1040
      %v1134 = vpack.c.bf16 %v1042, %v1042
      %v1135 = vpack.c.bf16 %v1045, %v1045
      %v1136 = vpack.c.bf16 %v1047, %v1047
      %v1137 = vpack.c.bf16 %v1050, %v1050
      %v1138 = vpack.c.bf16 %v1052, %v1052
      %v1139 = vpack.c.bf16 %v1055, %v1055
      %v1140 = vpack.c.bf16 %v1057, %v1057
      %v1141 = vpack.c.bf16 %v1060, %v1060
      %v1142 = vpack.c.bf16 %v1062, %v1062
      %v1143 = vpack.c.bf16 %v1065, %v1065
      %v1144 = vpack.c.bf16 %v1067, %v1067
      %v1145 = vpack.c.bf16 %v1070, %v1070
      %v1146 = vpack.c.bf16 %v1072, %v1072
      %v1147 = vpack.c.bf16 %v1075, %v1075
      %v1148 = vpack.c.bf16 %v1077, %v1077
      %v1149 = vpack.c.bf16 %v1080, %v1080
      %v1150 = vpack.c.bf16 %v1082, %v1082
      %v1151 = vpack.c.bf16 %v1085, %v1085
      %v1152 = vpack.c.bf16 %v1087, %v1087
      %vm1153 = vcmask 519168
      %1154 = vst.msk [vmem:[%s213] sm:$0xf] %vm1153, %v1089
      %1155 = vst.msk [vmem:[%s213 + $0x4] sm:$0xf] %vm1153, %v1090
      %1156 = vst.msk [vmem:[%s213 + $0x8] sm:$0xf] %vm1153, %v1091
      %1157 = vst.msk [vmem:[%s213 + $0xc] sm:$0xf] %vm1153, %v1092
      %1158 = vst.msk [vmem:[%s213 + $0x10] sm:$0xf] %vm1153, %v1093
      %1159 = vst.msk [vmem:[%s213 + $0x14] sm:$0xf] %vm1153, %v1094
      %1160 = vst.msk [vmem:[%s213 + $0x18] sm:$0xf] %vm1153, %v1095
      %1161 = vst.msk [vmem:[%s213 + $0x1c] sm:$0xf] %vm1153, %v1096
      %1162 = vst.msk [vmem:[%s213 + $0x20] sm:$0xf] %vm1153, %v1097
      %1163 = vst.msk [vmem:[%s213 + $0x24] sm:$0xf] %vm1153, %v1098
      %1164 = vst.msk [vmem:[%s213 + $0x28] sm:$0xf] %vm1153, %v1099
      %1165 = vst.msk [vmem:[%s213 + $0x2c] sm:$0xf] %vm1153, %v1100
      %1166 = vst.msk [vmem:[%s213 + $0x30] sm:$0xf] %vm1153, %v1101
      %1167 = vst.msk [vmem:[%s213 + $0x34] sm:$0xf] %vm1153, %v1102
      %1168 = vst.msk [vmem:[%s213 + $0x38] sm:$0xf] %vm1153, %v1103
      %1169 = vst.msk [vmem:[%s213 + $0x3c] sm:$0xf] %vm1153, %v1104
      %1170 = vst.msk [vmem:[%s213 + $0x40] sm:$0xf] %vm1153, %v1105
      %1171 = vst.msk [vmem:[%s213 + $0x44] sm:$0xf] %vm1153, %v1106
      %1172 = vst.msk [vmem:[%s213 + $0x48] sm:$0xf] %vm1153, %v1107
      %1173 = vst.msk [vmem:[%s213 + $0x4c] sm:$0xf] %vm1153, %v1108
      %1174 = vst.msk [vmem:[%s213 + $0x50] sm:$0xf] %vm1153, %v1109
      %1175 = vst.msk [vmem:[%s213 + $0x54] sm:$0xf] %vm1153, %v1110
      %1176 = vst.msk [vmem:[%s213 + $0x58] sm:$0xf] %vm1153, %v1111
      %1177 = vst.msk [vmem:[%s213 + $0x5c] sm:$0xf] %vm1153, %v1112
      %1178 = vst.msk [vmem:[%s213 + $0x60] sm:$0xf] %vm1153, %v1113
      %1179 = vst.msk [vmem:[%s213 + $0x64] sm:$0xf] %vm1153, %v1114
      %1180 = vst.msk [vmem:[%s213 + $0x68] sm:$0xf] %vm1153, %v1115
      %1181 = vst.msk [vmem:[%s213 + $0x6c] sm:$0xf] %vm1153, %v1116
      %1182 = vst.msk [vmem:[%s213 + $0x70] sm:$0xf] %vm1153, %v1117
      %1183 = vst.msk [vmem:[%s213 + $0x74] sm:$0xf] %vm1153, %v1118
      %1184 = vst.msk [vmem:[%s213 + $0x78] sm:$0xf] %vm1153, %v1119
      %1185 = vst.msk [vmem:[%s213 + $0x7c] sm:$0xf] %vm1153, %v1120
      %1186 = vst.msk [vmem:[%s213 + $0x80] sm:$0xf] %vm1153, %v1121
      %1187 = vst.msk [vmem:[%s213 + $0x84] sm:$0xf] %vm1153, %v1122
      %1188 = vst.msk [vmem:[%s213 + $0x88] sm:$0xf] %vm1153, %v1123
      %1189 = vst.msk [vmem:[%s213 + $0x8c] sm:$0xf] %vm1153, %v1124
      %1190 = vst.msk [vmem:[%s213 + $0x90] sm:$0xf] %vm1153, %v1125
      %1191 = vst.msk [vmem:[%s213 + $0x94] sm:$0xf] %vm1153, %v1126
      %1192 = vst.msk [vmem:[%s213 + $0x98] sm:$0xf] %vm1153, %v1127
      %1193 = vst.msk [vmem:[%s213 + $0x9c] sm:$0xf] %vm1153, %v1128
      %1194 = vst.msk [vmem:[%s213 + $0xa0] sm:$0xf] %vm1153, %v1129
      %1195 = vst.msk [vmem:[%s213 + $0xa4] sm:$0xf] %vm1153, %v1130
      %1196 = vst.msk [vmem:[%s213 + $0xa8] sm:$0xf] %vm1153, %v1131
      %1197 = vst.msk [vmem:[%s213 + $0xac] sm:$0xf] %vm1153, %v1132
      %1198 = vst.msk [vmem:[%s213 + $0xb0] sm:$0xf] %vm1153, %v1133
      %1199 = vst.msk [vmem:[%s213 + $0xb4] sm:$0xf] %vm1153, %v1134
      %1200 = vst.msk [vmem:[%s213 + $0xb8] sm:$0xf] %vm1153, %v1135
      %1201 = vst.msk [vmem:[%s213 + $0xbc] sm:$0xf] %vm1153, %v1136
      %1202 = vst.msk [vmem:[%s213 + $0xc0] sm:$0xf] %vm1153, %v1137
      %1203 = vst.msk [vmem:[%s213 + $0xc4] sm:$0xf] %vm1153, %v1138
      %1204 = vst.msk [vmem:[%s213 + $0xc8] sm:$0xf] %vm1153, %v1139
      %1205 = vst.msk [vmem:[%s213 + $0xcc] sm:$0xf] %vm1153, %v1140
      %1206 = vst.msk [vmem:[%s213 + $0xd0] sm:$0xf] %vm1153, %v1141
      %1207 = vst.msk [vmem:[%s213 + $0xd4] sm:$0xf] %vm1153, %v1142
      %1208 = vst.msk [vmem:[%s213 + $0xd8] sm:$0xf] %vm1153, %v1143
      %1209 = vst.msk [vmem:[%s213 + $0xdc] sm:$0xf] %vm1153, %v1144
      %1210 = vst.msk [vmem:[%s213 + $0xe0] sm:$0xf] %vm1153, %v1145
      %1211 = vst.msk [vmem:[%s213 + $0xe4] sm:$0xf] %vm1153, %v1146
      %1212 = vst.msk [vmem:[%s213 + $0xe8] sm:$0xf] %vm1153, %v1147
      %1213 = vst.msk [vmem:[%s213 + $0xec] sm:$0xf] %vm1153, %v1148
      %1214 = vst.msk [vmem:[%s213 + $0xf0] sm:$0xf] %vm1153, %v1149
      %1215 = vst.msk [vmem:[%s213 + $0xf4] sm:$0xf] %vm1153, %v1150
      %1216 = vst.msk [vmem:[%s213 + $0xf8] sm:$0xf] %vm1153, %v1151
      %1217 = vst.msk [vmem:[%s213 + $0xfc] sm:$0xf] %vm1153, %v1152
      %vm1218 = vcmask 523264
      %v1219 = vsel %vm1218, %v930, 0.0
      %v1220 = vsel %vm1218, %v932, 0.0
      %v1221 = vadd.f32 %v1219, %v1220
      %v1222 = vsel %vm1218, %v935, 0.0
      %v1223 = vadd.f32 %v1221, %v1222
      %v1224 = vsel %vm1218, %v937, 0.0
      %v1225 = vadd.f32 %v1223, %v1224
      %v1226 = vsel %vm1218, %v940, 0.0
      %v1227 = vadd.f32 %v1225, %v1226
      %v1228 = vsel %vm1218, %v942, 0.0
      %v1229 = vadd.f32 %v1227, %v1228
      %v1230 = vsel %vm1218, %v945, 0.0
      %v1231 = vadd.f32 %v1229, %v1230
      %v1232 = vsel %vm1218, %v947, 0.0
      %v1233 = vadd.f32 %v1231, %v1232
      %v1234 = vsel %vm1218, %v950, 0.0
      %v1235 = vadd.f32 %v1233, %v1234
      %v1236 = vsel %vm1218, %v952, 0.0
      %v1237 = vadd.f32 %v1235, %v1236
      %v1238 = vsel %vm1218, %v955, 0.0
      %v1239 = vadd.f32 %v1237, %v1238
      %v1240 = vsel %vm1218, %v957, 0.0
      %v1241 = vadd.f32 %v1239, %v1240
      %v1242 = vsel %vm1218, %v960, 0.0
      %v1243 = vadd.f32 %v1241, %v1242
      %v1244 = vsel %vm1218, %v962, 0.0
      %v1245 = vadd.f32 %v1243, %v1244
      %v1246 = vsel %vm1218, %v965, 0.0
      %v1247 = vadd.f32 %v1245, %v1246
      %v1248 = vsel %vm1218, %v967, 0.0
      %v1249 = vadd.f32 %v1247, %v1248
      %v1250 = vsel %vm1218, %v970, 0.0
      %v1251 = vadd.f32 %v1249, %v1250
      %v1252 = vsel %vm1218, %v972, 0.0
      %v1253 = vadd.f32 %v1251, %v1252
      %v1254 = vsel %vm1218, %v975, 0.0
      %v1255 = vadd.f32 %v1253, %v1254
      %v1256 = vsel %vm1218, %v977, 0.0
      %v1257 = vadd.f32 %v1255, %v1256
      %v1258 = vsel %vm1218, %v980, 0.0
      %v1259 = vadd.f32 %v1257, %v1258
      %v1260 = vsel %vm1218, %v982, 0.0
      %v1261 = vadd.f32 %v1259, %v1260
      %v1262 = vsel %vm1218, %v985, 0.0
      %v1263 = vadd.f32 %v1261, %v1262
      %v1264 = vsel %vm1218, %v987, 0.0
      %v1265 = vadd.f32 %v1263, %v1264
      %v1266 = vsel %vm1218, %v990, 0.0
      %v1267 = vadd.f32 %v1265, %v1266
      %v1268 = vsel %vm1218, %v992, 0.0
      %v1269 = vadd.f32 %v1267, %v1268
      %v1270 = vsel %vm1218, %v995, 0.0
      %v1271 = vadd.f32 %v1269, %v1270
      %v1272 = vsel %vm1218, %v997, 0.0
      %v1273 = vadd.f32 %v1271, %v1272
      %v1274 = vsel %vm1218, %v1000, 0.0
      %v1275 = vadd.f32 %v1273, %v1274
      %v1276 = vsel %vm1218, %v1002, 0.0
      %v1277 = vadd.f32 %v1275, %v1276
      %v1278 = vsel %vm1218, %v1005, 0.0
      %v1279 = vadd.f32 %v1277, %v1278
      %v1280 = vsel %vm1218, %v1007, 0.0
      %v1281 = vadd.f32 %v1279, %v1280
      %v1282 = vsel %vm1218, %v1010, 0.0
      %v1283 = vadd.f32 %v1281, %v1282
      %v1284 = vsel %vm1218, %v1012, 0.0
      %v1285 = vadd.f32 %v1283, %v1284
      %v1286 = vsel %vm1218, %v1015, 0.0
      %v1287 = vadd.f32 %v1285, %v1286
      %v1288 = vsel %vm1218, %v1017, 0.0
      %v1289 = vadd.f32 %v1287, %v1288
      %v1290 = vsel %vm1218, %v1020, 0.0
      %v1291 = vadd.f32 %v1289, %v1290
      %v1292 = vsel %vm1218, %v1022, 0.0
      %v1293 = vadd.f32 %v1291, %v1292
      %v1294 = vsel %vm1218, %v1025, 0.0
      %v1295 = vadd.f32 %v1293, %v1294
      %v1296 = vsel %vm1218, %v1027, 0.0
      %v1297 = vadd.f32 %v1295, %v1296
      %v1298 = vsel %vm1218, %v1030, 0.0
      %v1299 = vadd.f32 %v1297, %v1298
      %v1300 = vsel %vm1218, %v1032, 0.0
      %v1301 = vadd.f32 %v1299, %v1300
      %v1302 = vsel %vm1218, %v1035, 0.0
      %v1303 = vadd.f32 %v1301, %v1302
      %v1304 = vsel %vm1218, %v1037, 0.0
      %v1305 = vadd.f32 %v1303, %v1304
      %v1306 = vsel %vm1218, %v1040, 0.0
      %v1307 = vadd.f32 %v1305, %v1306
      %v1308 = vsel %vm1218, %v1042, 0.0
      %v1309 = vadd.f32 %v1307, %v1308
      %v1310 = vsel %vm1218, %v1045, 0.0
      %v1311 = vadd.f32 %v1309, %v1310
      %v1312 = vsel %vm1218, %v1047, 0.0
      %v1313 = vadd.f32 %v1311, %v1312
      %v1314 = vsel %vm1218, %v1050, 0.0
      %v1315 = vadd.f32 %v1313, %v1314
      %v1316 = vsel %vm1218, %v1052, 0.0
      %v1317 = vadd.f32 %v1315, %v1316
      %v1318 = vsel %vm1218, %v1055, 0.0
      %v1319 = vadd.f32 %v1317, %v1318
      %v1320 = vsel %vm1218, %v1057, 0.0
      %v1321 = vadd.f32 %v1319, %v1320
      %v1322 = vsel %vm1218, %v1060, 0.0
      %v1323 = vadd.f32 %v1321, %v1322
      %v1324 = vsel %vm1218, %v1062, 0.0
      %v1325 = vadd.f32 %v1323, %v1324
      %v1326 = vsel %vm1218, %v1065, 0.0
      %v1327 = vadd.f32 %v1325, %v1326
      %v1328 = vsel %vm1218, %v1067, 0.0
      %v1329 = vadd.f32 %v1327, %v1328
      %v1330 = vsel %vm1218, %v1070, 0.0
      %v1331 = vadd.f32 %v1329, %v1330
      %v1332 = vsel %vm1218, %v1072, 0.0
      %v1333 = vadd.f32 %v1331, %v1332
      %v1334 = vsel %vm1218, %v1075, 0.0
      %v1335 = vadd.f32 %v1333, %v1334
      %v1336 = vsel %vm1218, %v1077, 0.0
      %v1337 = vadd.f32 %v1335, %v1336
      %v1338 = vsel %vm1218, %v1080, 0.0
      %v1339 = vadd.f32 %v1337, %v1338
      %v1340 = vsel %vm1218, %v1082, 0.0
      %v1341 = vadd.f32 %v1339, %v1340
      %v1342 = vsel %vm1218, %v1085, 0.0
      %v1343 = vadd.f32 %v1341, %v1342
      %v1344 = vsel %vm1218, %v1087, 0.0
      %v1345 = vadd.f32 %v1343, %v1344
      %v1346 = vrot.slane %v1345, 4
      %v1347 = vadd.f32 %v1345, %v1346
      %v1348 = vrot.slane %v1347, 2
      %v1349 = vadd.f32 %v1347, %v1348
      %v1350 = vrot.slane %v1349, 1
      %v1351 = vadd.f32 %v1349, %v1350
      %vm1352 = vcmask 516096
      %1353 = vst.msk [vmem:[%s217] sm:$0x1] %vm1352, %v1351
      %v1354 = vmul.f32 %v930, %v930
      %v1355 = vmul.f32 %v932, %v932
      %v1356 = vmul.f32 %v935, %v935
      %v1357 = vmul.f32 %v937, %v937
      %v1358 = vmul.f32 %v940, %v940
      %v1359 = vmul.f32 %v942, %v942
      %v1360 = vmul.f32 %v945, %v945
      %v1361 = vmul.f32 %v947, %v947
      %v1362 = vmul.f32 %v950, %v950
      %v1363 = vmul.f32 %v952, %v952
      %v1364 = vmul.f32 %v955, %v955
      %v1365 = vmul.f32 %v957, %v957
      %v1366 = vmul.f32 %v960, %v960
      %v1367 = vmul.f32 %v962, %v962
      %v1368 = vmul.f32 %v965, %v965
      %v1369 = vmul.f32 %v967, %v967
      %v1370 = vmul.f32 %v970, %v970
      %v1371 = vmul.f32 %v972, %v972
      %v1372 = vmul.f32 %v975, %v975
      %v1373 = vmul.f32 %v977, %v977
      %v1374 = vmul.f32 %v980, %v980
      %v1375 = vmul.f32 %v982, %v982
      %v1376 = vmul.f32 %v985, %v985
      %v1377 = vmul.f32 %v987, %v987
      %v1378 = vmul.f32 %v990, %v990
      %v1379 = vmul.f32 %v992, %v992
      %v1380 = vmul.f32 %v995, %v995
      %v1381 = vmul.f32 %v997, %v997
      %v1382 = vmul.f32 %v1000, %v1000
      %v1383 = vmul.f32 %v1002, %v1002
      %v1384 = vmul.f32 %v1005, %v1005
      %v1385 = vmul.f32 %v1007, %v1007
      %v1386 = vmul.f32 %v1010, %v1010
      %v1387 = vmul.f32 %v1012, %v1012
      %v1388 = vmul.f32 %v1015, %v1015
      %v1389 = vmul.f32 %v1017, %v1017
      %v1390 = vmul.f32 %v1020, %v1020
      %v1391 = vmul.f32 %v1022, %v1022
      %v1392 = vmul.f32 %v1025, %v1025
      %v1393 = vmul.f32 %v1027, %v1027
      %v1394 = vmul.f32 %v1030, %v1030
      %v1395 = vmul.f32 %v1032, %v1032
      %v1396 = vmul.f32 %v1035, %v1035
      %v1397 = vmul.f32 %v1037, %v1037
      %v1398 = vmul.f32 %v1040, %v1040
      %v1399 = vmul.f32 %v1042, %v1042
      %v1400 = vmul.f32 %v1045, %v1045
      %v1401 = vmul.f32 %v1047, %v1047
      %v1402 = vmul.f32 %v1050, %v1050
      %v1403 = vmul.f32 %v1052, %v1052
      %v1404 = vmul.f32 %v1055, %v1055
      %v1405 = vmul.f32 %v1057, %v1057
      %v1406 = vmul.f32 %v1060, %v1060
      %v1407 = vmul.f32 %v1062, %v1062
      %v1408 = vmul.f32 %v1065, %v1065
      %v1409 = vmul.f32 %v1067, %v1067
      %v1410 = vmul.f32 %v1070, %v1070
      %v1411 = vmul.f32 %v1072, %v1072
      %v1412 = vmul.f32 %v1075, %v1075
      %v1413 = vmul.f32 %v1077, %v1077
      %v1414 = vmul.f32 %v1080, %v1080
      %v1415 = vmul.f32 %v1082, %v1082
      %v1416 = vmul.f32 %v1085, %v1085
      %v1417 = vmul.f32 %v1087, %v1087
      %v1418 = vsel %vm1218, %v1354, 0.0
      %v1419 = vsel %vm1218, %v1355, 0.0
      %v1420 = vadd.f32 %v1418, %v1419
      %v1421 = vsel %vm1218, %v1356, 0.0
      %v1422 = vadd.f32 %v1420, %v1421
      %v1423 = vsel %vm1218, %v1357, 0.0
      %v1424 = vadd.f32 %v1422, %v1423
      %v1425 = vsel %vm1218, %v1358, 0.0
      %v1426 = vadd.f32 %v1424, %v1425
      %v1427 = vsel %vm1218, %v1359, 0.0
      %v1428 = vadd.f32 %v1426, %v1427
      %v1429 = vsel %vm1218, %v1360, 0.0
      %v1430 = vadd.f32 %v1428, %v1429
      %v1431 = vsel %vm1218, %v1361, 0.0
      %v1432 = vadd.f32 %v1430, %v1431
      %v1433 = vsel %vm1218, %v1362, 0.0
      %v1434 = vadd.f32 %v1432, %v1433
      %v1435 = vsel %vm1218, %v1363, 0.0
      %v1436 = vadd.f32 %v1434, %v1435
      %v1437 = vsel %vm1218, %v1364, 0.0
      %v1438 = vadd.f32 %v1436, %v1437
      %v1439 = vsel %vm1218, %v1365, 0.0
      %v1440 = vadd.f32 %v1438, %v1439
      %v1441 = vsel %vm1218, %v1366, 0.0
      %v1442 = vadd.f32 %v1440, %v1441
      %v1443 = vsel %vm1218, %v1367, 0.0
      %v1444 = vadd.f32 %v1442, %v1443
      %v1445 = vsel %vm1218, %v1368, 0.0
      %v1446 = vadd.f32 %v1444, %v1445
      %v1447 = vsel %vm1218, %v1369, 0.0
      %v1448 = vadd.f32 %v1446, %v1447
      %v1449 = vsel %vm1218, %v1370, 0.0
      %v1450 = vadd.f32 %v1448, %v1449
      %v1451 = vsel %vm1218, %v1371, 0.0
      %v1452 = vadd.f32 %v1450, %v1451
      %v1453 = vsel %vm1218, %v1372, 0.0
      %v1454 = vadd.f32 %v1452, %v1453
      %v1455 = vsel %vm1218, %v1373, 0.0
      %v1456 = vadd.f32 %v1454, %v1455
      %v1457 = vsel %vm1218, %v1374, 0.0
      %v1458 = vadd.f32 %v1456, %v1457
      %v1459 = vsel %vm1218, %v1375, 0.0
      %v1460 = vadd.f32 %v1458, %v1459
      %v1461 = vsel %vm1218, %v1376, 0.0
      %v1462 = vadd.f32 %v1460, %v1461
      %v1463 = vsel %vm1218, %v1377, 0.0
      %v1464 = vadd.f32 %v1462, %v1463
      %v1465 = vsel %vm1218, %v1378, 0.0
      %v1466 = vadd.f32 %v1464, %v1465
      %v1467 = vsel %vm1218, %v1379, 0.0
      %v1468 = vadd.f32 %v1466, %v1467
      %v1469 = vsel %vm1218, %v1380, 0.0
      %v1470 = vadd.f32 %v1468, %v1469
      %v1471 = vsel %vm1218, %v1381, 0.0
      %v1472 = vadd.f32 %v1470, %v1471
      %v1473 = vsel %vm1218, %v1382, 0.0
      %v1474 = vadd.f32 %v1472, %v1473
      %v1475 = vsel %vm1218, %v1383, 0.0
      %v1476 = vadd.f32 %v1474, %v1475
      %v1477 = vsel %vm1218, %v1384, 0.0
      %v1478 = vadd.f32 %v1476, %v1477
      %v1479 = vsel %vm1218, %v1385, 0.0
      %v1480 = vadd.f32 %v1478, %v1479
      %v1481 = vsel %vm1218, %v1386, 0.0
      %v1482 = vadd.f32 %v1480, %v1481
      %v1483 = vsel %vm1218, %v1387, 0.0
      %v1484 = vadd.f32 %v1482, %v1483
      %v1485 = vsel %vm1218, %v1388, 0.0
      %v1486 = vadd.f32 %v1484, %v1485
      %v1487 = vsel %vm1218, %v1389, 0.0
      %v1488 = vadd.f32 %v1486, %v1487
      %v1489 = vsel %vm1218, %v1390, 0.0
      %v1490 = vadd.f32 %v1488, %v1489
      %v1491 = vsel %vm1218, %v1391, 0.0
      %v1492 = vadd.f32 %v1490, %v1491
      %v1493 = vsel %vm1218, %v1392, 0.0
      %v1494 = vadd.f32 %v1492, %v1493
      %v1495 = vsel %vm1218, %v1393, 0.0
      %v1496 = vadd.f32 %v1494, %v1495
      %v1497 = vsel %vm1218, %v1394, 0.0
      %v1498 = vadd.f32 %v1496, %v1497
      %v1499 = vsel %vm1218, %v1395, 0.0
      %v1500 = vadd.f32 %v1498, %v1499
      %v1501 = vsel %vm1218, %v1396, 0.0
      %v1502 = vadd.f32 %v1500, %v1501
      %v1503 = vsel %vm1218, %v1397, 0.0
      %v1504 = vadd.f32 %v1502, %v1503
      %v1505 = vsel %vm1218, %v1398, 0.0
      %v1506 = vadd.f32 %v1504, %v1505
      %v1507 = vsel %vm1218, %v1399, 0.0
      %v1508 = vadd.f32 %v1506, %v1507
      %v1509 = vsel %vm1218, %v1400, 0.0
      %v1510 = vadd.f32 %v1508, %v1509
      %v1511 = vsel %vm1218, %v1401, 0.0
      %v1512 = vadd.f32 %v1510, %v1511
      %v1513 = vsel %vm1218, %v1402, 0.0
      %v1514 = vadd.f32 %v1512, %v1513
      %v1515 = vsel %vm1218, %v1403, 0.0
      %v1516 = vadd.f32 %v1514, %v1515
      %v1517 = vsel %vm1218, %v1404, 0.0
      %v1518 = vadd.f32 %v1516, %v1517
      %v1519 = vsel %vm1218, %v1405, 0.0
      %v1520 = vadd.f32 %v1518, %v1519
      %v1521 = vsel %vm1218, %v1406, 0.0
      %v1522 = vadd.f32 %v1520, %v1521
      %v1523 = vsel %vm1218, %v1407, 0.0
      %v1524 = vadd.f32 %v1522, %v1523
      %v1525 = vsel %vm1218, %v1408, 0.0
      %v1526 = vadd.f32 %v1524, %v1525
      %v1527 = vsel %vm1218, %v1409, 0.0
      %v1528 = vadd.f32 %v1526, %v1527
      %v1529 = vsel %vm1218, %v1410, 0.0
      %v1530 = vadd.f32 %v1528, %v1529
      %v1531 = vsel %vm1218, %v1411, 0.0
      %v1532 = vadd.f32 %v1530, %v1531
      %v1533 = vsel %vm1218, %v1412, 0.0
      %v1534 = vadd.f32 %v1532, %v1533
      %v1535 = vsel %vm1218, %v1413, 0.0
      %v1536 = vadd.f32 %v1534, %v1535
      %v1537 = vsel %vm1218, %v1414, 0.0
      %v1538 = vadd.f32 %v1536, %v1537
      %v1539 = vsel %vm1218, %v1415, 0.0
      %v1540 = vadd.f32 %v1538, %v1539
      %v1541 = vsel %vm1218, %v1416, 0.0
      %v1542 = vadd.f32 %v1540, %v1541
      %v1543 = vsel %vm1218, %v1417, 0.0
      %v1544 = vadd.f32 %v1542, %v1543
      %v1545 = vrot.slane %v1544, 4
      %v1546 = vadd.f32 %v1544, %v1545
      %v1547 = vrot.slane %v1546, 2
      %v1548 = vadd.f32 %v1546, %v1547
      %v1549 = vrot.slane %v1548, 1
      %v1550 = vadd.f32 %v1548, %v1549
      %1551 = vst.msk [vmem:[%s220] sm:$0x1] %vm1352, %v1550
      %s1552 = smul.u32 64, %s16
      %p1553 = scmp.lt.s32.totalorder %s1552, 255
      %s1554 = scalar_select %p1553, %s1552, 255
      %s1555 = smul.addr %s1554, 4
      %s1556 = scalar_lea.vmem %s2, %s1555
      %p1557 = scmp.lt.s32.totalorder %s16, 3
      %s1558 = scalar_select %p1557, %s16, 3
      %s1559 = scalar_lea.vmem %s3, %s1558
      %p1560 = scmp.lt.s32.totalorder %s16, 3
      %s1561 = scalar_select %p1560, %s16, 3
      %s1562 = scalar_lea.vmem %s4, %s1561
      // Predicated region
      $region29: #{conv_bn.2} parent=27 // pred_check
        %p1563 = pneg %p81
      $region30: #{conv_bn.2} parent=27 // pred_check_branch
        %1565 = sbr.rel (%p1563) target = $region32
      $region31: #{conv_bn.2} parent=27 // pred_region
        %s1566 = smul.u32 64, %s16
      $region32: #{conv_bn.2} parent=27 // pred_fallthru
        _
      // Predicated region
      $region33: #{conv_bn.2} parent=27 // pred_check
        %p1567 = pneg %p107
      $region34: #{conv_bn.2} parent=27 // pred_check_branch
        %1569 = sbr.rel (%p1567) target = $region36
      $region35: #{conv_bn.2} parent=27 // pred_region
        _
      $region36: #{conv_bn.2} parent=27 // pred_fallthru
        _
      // Predicated region
      $region37: #{conv_bn.2} parent=27 // pred_check
        %p1570 = pneg %p133
      $region38: #{conv_bn.2} parent=27 // pred_check_branch
        %1572 = sbr.rel (%p1570) target = $region40
      $region39: #{conv_bn.2} parent=27 // pred_region
        _
      $region40: #{conv_bn.2} parent=27 // pred_fallthru
        _
    $region28: #{conv_bn.2} parent=5 // pred_fallthru
      _
    %p1573 = scmp.le.s32.totalorder 2, %s11
    // Predicated region
    $region41: #{conv_bn.2} parent=5 // pred_check
      %p1574 = pneg %p1573
    $region42: #{conv_bn.2} parent=5 // pred_check_branch
      %1576 = sbr.rel (%p1574) target = $region44
    $region43: #{conv_bn.2} parent=5 // pred_region
      %s1577 = ssub.s32 %s11, 2
      // Predicated region
      $region45: #{conv_bn.2} parent=43 // pred_check
        %p1578 = pneg %p87
      $region46: #{conv_bn.2} parent=43 // pred_check_branch
        %1580 = sbr.rel (%p1578) target = $region48
      $region47: #{conv_bn.2} parent=43 // pred_region
        %s1581 = smul.u32 64, %s17
        %p1582 = scmp.lt.s32.totalorder %s1581, 255
        %s1583 = scalar_select %p1582, %s1581, 255
        %s1584 = smul.addr %s1583, 4
        %s1585 = scalar_lea.vmem %s2, %s1584
      $region48: #{conv_bn.2} parent=43 // pred_fallthru
        _
      // Predicated region
      $region49: #{conv_bn.2} parent=43 // pred_check
        %p1586 = pneg %p113
      $region50: #{conv_bn.2} parent=43 // pred_check_branch
        %1588 = sbr.rel (%p1586) target = $region52
      $region51: #{conv_bn.2} parent=43 // pred_region
        %p1589 = scmp.lt.s32.totalorder %s17, 3
        %s1590 = scalar_select %p1589, %s17, 3
        %s1591 = scalar_lea.vmem %s3, %s1590
      $region52: #{conv_bn.2} parent=43 // pred_fallthru
        _
      // Predicated region
      $region53: #{conv_bn.2} parent=43 // pred_check
        %p1592 = pneg %p139
      $region54: #{conv_bn.2} parent=43 // pred_check_branch
        %1594 = sbr.rel (%p1592) target = $region56
      $region55: #{conv_bn.2} parent=43 // pred_region
        %p1595 = scmp.lt.s32.totalorder %s17, 3
        %s1596 = scalar_select %p1595, %s17, 3
        %s1597 = scalar_lea.vmem %s4, %s1596
      $region56: #{conv_bn.2} parent=43 // pred_fallthru
        _
    $region44: #{conv_bn.2} parent=5 // pred_fallthru
      _
  $region6: #{conv_bn.2} parent=0 // loop_footer
    %s15 = sadd.s32 1, %s11
  $region7: #{conv_bn.2} parent=0 // loop_footer_branch
    %10 = sbr.rel target = $region3
  $region8: #{conv_bn.2} parent=0 // loop_exit
    _

</llo_original>
